<compile_context>
chip_gen: v5e
topology: v5e:2x2
jax: 0.10.0
libtpu: 0.0.40
codegen_flags: <defaults>
</compile_context>

<pallas_src>
import jax
import jax.numpy as jnp
from jax.experimental import pallas as pl
from jax.experimental.pallas import tpu as pltpu


def _round_up(x, m):
  return ((x + m - 1) // m) * m


def decoder_kernel(
    emb_ref, s_ref, enc_ref,
    w_s_all_ref, wa_e_ref, v_ref,
    w_i_e_ref, w_i_c_ref, b_i_ref, b_h_ref,
    w_f_h_ref, w_f_c_ref, w_f_e_ref, b_f_ref,
    pred_ref, h_ref,
    h_scr, c_scr):
  """Grid = (batch tile b, fc_out column tile j).

  Attention + GRU run once per batch tile (j == 0), results cached in VMEM
  scratch; every j computes one (TILE_B, TILE_OP) tile of fc_out while the
  corresponding bf16 w_f column tiles stream in (double-buffered).
  """
  j = pl.program_id(1)

  @pl.when(j == 0)
  def _attention_and_gru():
    emb = emb_ref[...]                                   # [TB, E]    f32
    s = s_ref[...]                                       # [TB, Hp]   f32 (zero-padded cols)
    enc = enc_ref[...]                                   # [L, TB, E2] bf16 (native layout)
    L, TB, E2 = enc.shape
    Hp = s.shape[1]

    # Fused s matmul: [wa_s | wh_r | wh_z | wh_n] -> one MXU pass, N = 4*Hp.
    s_all = jnp.dot(s.astype(jnp.bfloat16), w_s_all_ref[...],
                    preferred_element_type=jnp.float32)  # [TB, 4*Hp]
    s_proj = s_all[:, :Hp]                               # attention projection of s
    gh = s_all[:, Hp:] + b_h_ref[...]                    # GRU hidden gates [r|z|n]

    # Attention: softmax_L( v . tanh(W_e enc + W_s s) ), keepdims layout.
    e_proj = jnp.dot(enc.reshape(L * TB, E2), wa_e_ref[...],
                     preferred_element_type=jnp.float32).reshape(L, TB, Hp)
    energy = jnp.tanh(e_proj + s_proj[None, :, :])       # [L, TB, Hp] f32
    score = jnp.sum(energy * v_ref[...], axis=-1, keepdims=True)      # [L, TB, 1]
    score = score - jnp.max(score, axis=0, keepdims=True)
    p = jnp.exp(score)
    a = p * pl.reciprocal(jnp.sum(p, axis=0, keepdims=True), approx=True)
    # Context: a broadcast over E2 is a free lane-broadcast (TB stays on sublanes).
    c = jnp.sum(a * enc, axis=0)                         # [TB, E2] f32

    emb_bf = emb.astype(jnp.bfloat16)
    c_bf = c.astype(jnp.bfloat16)

    # Single-step GRU, fused gate columns [r | z | n] (each Hp wide, lane-aligned).
    gi = (jnp.dot(emb_bf, w_i_e_ref[...], preferred_element_type=jnp.float32)
          + jnp.dot(c_bf, w_i_c_ref[...], preferred_element_type=jnp.float32)
          + b_i_ref[...])                                # [TB, 3*Hp]
    r = jax.nn.sigmoid(gi[:, :Hp] + gh[:, :Hp])
    z = jax.nn.sigmoid(gi[:, Hp:2 * Hp] + gh[:, Hp:2 * Hp])
    n = jnp.tanh(gi[:, 2 * Hp:] + r * gh[:, 2 * Hp:])
    h_new = (1.0 - z) * n + z * s                        # [TB, Hp]

    h_ref[...] = h_new.astype(h_ref.dtype)
    h_scr[...] = h_new.astype(h_scr.dtype)               # bf16 copy for fc_out tiles
    c_scr[...] = c_bf

  # fc_out(cat(dec_output, c, embedded)) for this Op column tile (every j).
  pred = (jnp.dot(h_scr[...], w_f_h_ref[...], preferred_element_type=jnp.float32)
          + jnp.dot(c_scr[...], w_f_c_ref[...], preferred_element_type=jnp.float32)
          + jnp.dot(emb_ref[...].astype(jnp.bfloat16), w_f_e_ref[...],
                    preferred_element_type=jnp.float32)
          + b_f_ref[...])                                # [TB, TILE_OP]
  pred_ref[...] = pred.astype(pred_ref.dtype)


def pack_params(params, lane=128, weight_dtype=jnp.bfloat16):
  """One-time: fuse GRU / attention weights, pad H and O to 128 lanes, and cast
  the large weights to bf16 for storage / DMA / MXU (biases stay f32)."""
  E2, H = params["wa_e"].shape
  E = params["wf_e"].shape[0]
  O = params["wf_h"].shape[1]
  Hp = _round_up(H, lane)
  Op = _round_up(O, lane)
  wd = weight_dtype

  def pad2(w, rows, cols, dtype=jnp.float32):
    return jnp.pad(w, ((0, rows - w.shape[0]), (0, cols - w.shape[1]))).astype(dtype)

  # Everything that multiplies s, fused into one [Hp, 4*Hp]: [wa_s | wh_r | wh_z | wh_n].
  w_s_all = jnp.concatenate([pad2(params["wa_s"], Hp, Hp, wd),
                             pad2(params["wh_r"], Hp, Hp, wd),
                             pad2(params["wh_z"], Hp, Hp, wd),
                             pad2(params["wh_n"], Hp, Hp, wd)], axis=1)
  # GRU input weights split by input block (emb / c) so the kernel never row-slices.
  w_i_e = jnp.concatenate([pad2(params["wi_r"][:E], E, Hp, wd),
                           pad2(params["wi_z"][:E], E, Hp, wd),
                           pad2(params["wi_n"][:E], E, Hp, wd)], axis=1)   # [E, 3Hp]
  w_i_c = jnp.concatenate([pad2(params["wi_r"][E:], E2, Hp, wd),
                           pad2(params["wi_z"][E:], E2, Hp, wd),
                           pad2(params["wi_n"][E:], E2, Hp, wd)], axis=1)  # [E2, 3Hp]
  b_i = jnp.concatenate([pad2(params["b_ir"], 1, Hp),
                         pad2(params["b_iz"], 1, Hp),
                         pad2(params["b_in"], 1, Hp)], axis=1)             # [1, 3Hp]
  b_h = jnp.concatenate([pad2(params["b_hr"], 1, Hp),
                         pad2(params["b_hz"], 1, Hp),
                         pad2(params["b_hn"], 1, Hp)], axis=1)             # [1, 3Hp]
  return dict(
      embedding=params["embedding"],
      wa_e=pad2(params["wa_e"], E2, Hp, wd),
      v=pad2(params["v"], 1, Hp),
      w_s_all=w_s_all,
      w_i_e=w_i_e, w_i_c=w_i_c, b_i=b_i, b_h=b_h,
      # fc_out split by input block [dec_output | c | embedded]; columns padded to Op.
      w_f_h=pad2(params["wf_h"], Hp, Op, wd),
      w_f_c=pad2(params["wf_c"], E2, Op, wd),
      w_f_e=pad2(params["wf_e"], E, Op, wd),
      b_f=pad2(params["fc_b"], 1, Op),
  )


def decoder_forward(packed, dec_input, s, enc_output):
  """dec_input: [B] int32, s: [B, H] f32, enc_output: [L, B, 2*enc_hid] (PyTorch layout)."""
  B = dec_input.shape[0]
  L, _, E2 = enc_output.shape
  E = packed["embedding"].shape[1]
  O = packed["embedding"].shape[0]
  H = s.shape[1]
  Hp = packed["wa_e"].shape[1]
  Op = packed["b_f"].shape[1]

  # ---- glue (cheap): embedding gather, batch pad to a multiple of 8 only ----
  # TODO(synk): an in-kernel scalar-prefetch embedding gather conflicts with the
  # batch-tiled grid; the gather (and eval-mode dropout identity) stays in XLA glue.
  B_pad8 = _round_up(B, 8)
  embedded = jnp.take(packed["embedding"], dec_input, axis=0)            # [B, E]
  embedded = jnp.pad(embedded, ((0, B_pad8 - B), (0, 0)))
  s_pad = jnp.pad(s, ((0, B_pad8 - B), (0, Hp - H)))
  # bf16 halves the dominant enc HBM read; the <=7 pad rows fuse into the same
  # XLA convert (if the encoder already emits bf16 and B % 8 == 0 this is a no-op).
  enc_in = jnp.pad(enc_output.astype(jnp.bfloat16),
                   ((0, 0), (0, B_pad8 - B), (0, 0)))                    # [L, B_pad8, E2]

  # ---- tiling ----
  if B_pad8 <= 8:
    TILE_B = B_pad8
  else:
    # >= 2 batch tiles so both v7x TensorCores get work (negligible extra cost
    # on single-TC v5e/v6e); <= 128 rows per tile.
    # TODO(synk): gate the split / VMEM budget by generation via pltpu.get_tpu_info().
    TILE_B = min(128, _round_up(pl.cdiv(B_pad8, 2), 8))

  TILE_OP = 128
  for cand in (512, 384, 256, 128):
    if Op % cand == 0:
      TILE_OP = cand
      break

  def vmem_bytes(tb):
    enc_tile = 2 * L * tb * E2 * 2                       # double-buffered bf16 enc tile
    io_tiles = 2 * tb * (E + 2 * Hp + TILE_OP) * 4       # emb/s in + pred/h out
    wf_tiles = 2 * ((Hp + E2 + E) * TILE_OP * 2 + TILE_OP * 4)
    inv_weights = (4 * Hp * Hp + E2 * Hp + 3 * Hp * (E + E2)) * 2 + 7 * Hp * 4
    interm = 2 * L * tb * Hp * 4 + tb * (Hp + E2) * 2    # e_proj/energy f32 + scratch
    return enc_tile + io_tiles + wf_tiles + inv_weights + interm

  # Keep the working set well under v7x's 64 MiB physical VMEM.
  while TILE_B > 8 and vmem_bytes(TILE_B) > (40 << 20):
    TILE_B = _round_up(TILE_B // 2, 8)

  grid = (pl.cdiv(B_pad8, TILE_B), Op // TILE_OP)        # ragged last batch tile is OK
  vmem_limit = int(min(64 << 20, max(32 << 20, 2 * vmem_bytes(TILE_B))))

  out_shape = (jax.ShapeDtypeStruct((B_pad8, Op), jnp.float32),
               jax.ShapeDtypeStruct((B_pad8, Hp), jnp.float32))
  out_specs = [
      pl.BlockSpec((TILE_B, TILE_OP), lambda b, j: (b, j)),   # pred (lane-dense)
      pl.BlockSpec((TILE_B, Hp), lambda b, j: (b, 0)),        # dec_hidden (revisited over j)
  ]
  scratch_shapes = [pltpu.VMEM((TILE_B, Hp), jnp.bfloat16),   # h_new for fc_out tiles
                    pltpu.VMEM((TILE_B, E2), jnp.bfloat16)]   # context c for fc_out tiles

  weights = (packed["w_s_all"], packed["wa_e"], packed["v"],
             packed["w_i_e"], packed["w_i_c"], packed["b_i"], packed["b_h"])

  def run(single_buffer_weights):
    if single_buffer_weights:
      # Grid-invariant weights are DMA'd once; single-buffer them so they don't
      # reserve 2x VMEM (biggest saver on v7x's 64 MiB VMEM).
      inv = lambda w: pl.BlockSpec(w.shape, lambda b, j: (0, 0),
                                   pipeline_mode=pl.Buffered(1))
    else:
      inv = lambda w: pl.BlockSpec(w.shape, lambda b, j: (0, 0))
    in_specs = [
        pl.BlockSpec((TILE_B, E), lambda b, j: (b, 0)),        # embedded tile
        pl.BlockSpec((TILE_B, Hp), lambda b, j: (b, 0)),       # s tile (lane-padded)
        pl.BlockSpec((L, TILE_B, E2), lambda b, j: (0, b, 0)), # enc tile, native layout
    ] + [inv(w) for w in weights] + [
        # fc_out weight column tiles stream over j (default double-buffering).
        pl.BlockSpec((Hp, TILE_OP), lambda b, j: (0, j)),
        pl.BlockSpec((E2, TILE_OP), lambda b, j: (0, j)),
        pl.BlockSpec((E, TILE_OP), lambda b, j: (0, j)),
        pl.BlockSpec((1, TILE_OP), lambda b, j: (0, j)),
    ]
    return pl.pallas_call(
        decoder_kernel,
        out_shape=out_shape,
        grid_spec=pltpu.PrefetchScalarGridSpec(
            num_scalar_prefetch=0,
            grid=grid,
            in_specs=in_specs,
            out_specs=out_specs,
            scratch_shapes=scratch_shapes),
        compiler_params=pltpu.CompilerParams(
            dimension_semantics=("parallel", "arbitrary"),
            vmem_limit_bytes=vmem_limit),
    )(embedded, s_pad, enc_in, *weights,
      packed["w_f_h"], packed["w_f_c"], packed["w_f_e"], packed["b_f"])

  try:
    pred_p, h_p = run(single_buffer_weights=True)
  except Exception:
    # Fallback if this jax build rejects pipeline_mode=pl.Buffered(1).
    pred_p, h_p = run(single_buffer_weights=False)

  return pred_p[:B, :O], h_p[:B, :H]


def init_params(key, output_dim, emb_dim, enc_hid, dec_hid):
  """Unfused, torch-like parameterization (attention / GRU / fc_out)."""
  E2 = 2 * enc_hid
  keys = jax.random.split(key, 20)
  u = lambda k, shape: jax.random.uniform(k, shape, jnp.float32, -0.1, 0.1)
  return dict(
      embedding=u(keys[0], (output_dim, emb_dim)),
      # attention: Linear(E2 + H -> H, bias=False) split into s / enc parts (transposed)
      wa_s=u(keys[1], (dec_hid, dec_hid)),
      wa_e=u(keys[2], (E2, dec_hid)),
      v=u(keys[3], (1, dec_hid)),
      # GRU weights (transposed, per gate); input feature order [emb | c]
      wi_r=u(keys[4], (emb_dim + E2, dec_hid)),
      wi_z=u(keys[5], (emb_dim + E2, dec_hid)),
      wi_n=u(keys[6], (emb_dim + E2, dec_hid)),
      wh_r=u(keys[7], (dec_hid, dec_hid)),
      wh_z=u(keys[8], (dec_hid, dec_hid)),
      wh_n=u(keys[9], (dec_hid, dec_hid)),
      b_ir=u(keys[10], (1, dec_hid)), b_iz=u(keys[11], (1, dec_hid)),
      b_in=u(keys[12], (1, dec_hid)),
      b_hr=u(keys[13], (1, dec_hid)), b_hz=u(keys[14], (1, dec_hid)),
      b_hn=u(keys[15], (1, dec_hid)),
      # fc_out: Linear(H + E2 + E -> O) split by input block [dec_output | c | embedded]
      wf_h=u(keys[16], (dec_hid, output_dim)),
      wf_c=u(keys[17], (E2, output_dim)),
      wf_e=u(keys[18], (emb_dim, output_dim)),
      fc_b=u(keys[19], (1, output_dim)),
  )


def decoder_reference(params, dec_input, s, enc_output):
  """Pure-JAX f32 reference mirroring the PyTorch forward (unfused params)."""
  embedded = params["embedding"][dec_input]                       # [B, E]
  enc_bf = jnp.transpose(enc_output, (1, 0, 2))                   # [B, L, E2]
  s_proj = s @ params["wa_s"]
  e_proj = jnp.einsum("ble,eh->blh", enc_bf, params["wa_e"])
  energy = jnp.tanh(e_proj + s_proj[:, None, :])
  score = jnp.einsum("blh,h->bl", energy, params["v"][0])         # [B, L]
  a = jax.nn.softmax(score, axis=-1)
  c = jnp.einsum("bl,ble->be", a, enc_bf)                         # [B, E2]
  x = jnp.concatenate([embedded, c], axis=1)
  r = jax.nn.sigmoid(x @ params["wi_r"] + params["b_ir"] + s @ params["wh_r"] + params["b_hr"])
  z = jax.nn.sigmoid(x @ params["wi_z"] + params["b_iz"] + s @ params["wh_z"] + params["b_hz"])
  n = jnp.tanh(x @ params["wi_n"] + params["b_in"] + r * (s @ params["wh_n"] + params["b_hn"]))
  h_new = (1.0 - z) * n + z * s
  pred = (h_new @ params["wf_h"] + c @ params["wf_c"]
          + embedded @ params["wf_e"] + params["fc_b"])
  return pred, h_new


if __name__ == "__main__":
  B, L = 2, 8
  output_dim, emb_dim, enc_hid, dec_hid = 64, 32, 32, 32

  key = jax.random.PRNGKey(0)
  kp, k1, k2, k3 = jax.random.split(key, 4)
  params = init_params(kp, output_dim, emb_dim, enc_hid, dec_hid)
  packed = pack_params(params)

  dec_input = jax.random.randint(k1, (B,), 0, output_dim, dtype=jnp.int32)
  s = jax.random.normal(k2, (B, dec_hid), jnp.float32)
  enc_output = jax.random.normal(k3, (L, B, 2 * enc_hid), jnp.float32)

  pred, dec_hidden = decoder_forward(packed, dec_input, s, enc_output)
  jax.block_until_ready((pred, dec_hidden))

  pred_ref, hidden_ref = decoder_reference(params, dec_input, s, enc_output)
  assert pred.shape == (B, output_dim) and dec_hidden.shape == (B, dec_hid)
  # bf16 enc/weights + approx-reciprocal softmax -> looser tolerance vs f32 reference
  assert jnp.allclose(pred, pred_ref, atol=5e-2, rtol=5e-2)
  assert jnp.allclose(dec_hidden, hidden_ref, atol=5e-2, rtol=5e-2)
  print("KERNEL_OK")
</pallas_src>

<mosaic_0001>
module attributes {stable_mosaic.version = 11 : i64} {
  func.func @decoder_kernel(%arg0: i32, %arg1: i32, %arg2: memref<8x32xf32, #tpu.memory_space<vmem>>, %arg3: memref<8x128xf32, #tpu.memory_space<vmem>>, %arg4: memref<8x8x64xbf16, #tpu.memory_space<vmem>>, %arg5: memref<128x512xbf16, #tpu.memory_space<vmem>>, %arg6: memref<64x128xbf16, #tpu.memory_space<vmem>>, %arg7: memref<1x128xf32, #tpu.memory_space<vmem>>, %arg8: memref<32x384xbf16, #tpu.memory_space<vmem>>, %arg9: memref<64x384xbf16, #tpu.memory_space<vmem>>, %arg10: memref<1x384xf32, #tpu.memory_space<vmem>>, %arg11: memref<1x384xf32, #tpu.memory_space<vmem>>, %arg12: memref<128x128xbf16, #tpu.memory_space<vmem>>, %arg13: memref<64x128xbf16, #tpu.memory_space<vmem>>, %arg14: memref<32x128xbf16, #tpu.memory_space<vmem>>, %arg15: memref<1x128xf32, #tpu.memory_space<vmem>>, %arg16: memref<8x128xf32, #tpu.memory_space<vmem>>, %arg17: memref<8x128xf32, #tpu.memory_space<vmem>>, %arg18: memref<8x128xbf16, #tpu.memory_space<vmem>>, %arg19: memref<8x64xbf16, #tpu.memory_space<vmem>>) attributes {dimension_semantics = [#tpu.dimension_semantics<parallel>, #tpu.dimension_semantics<arbitrary>], iteration_bounds = array<i64: 1, 1>, scalar_prefetch = 0 : i64, scratch_operands = 2 : i64, tpu.core_type = #tpu.core_type<tc>, window_params = [{transform_indices = @transform_0, window_bounds = array<i64: 8, 32>}, {transform_indices = @transform_1, window_bounds = array<i64: 8, 128>}, {transform_indices = @transform_2, window_bounds = array<i64: 8, 8, 64>}, {pipeline_mode = #tpu.pipeline_mode<synchronous>, transform_indices = @transform_3, window_bounds = array<i64: 128, 512>}, {pipeline_mode = #tpu.pipeline_mode<synchronous>, transform_indices = @transform_4, window_bounds = array<i64: 64, 128>}, {pipeline_mode = #tpu.pipeline_mode<synchronous>, transform_indices = @transform_5, window_bounds = array<i64: 1, 128>}, {pipeline_mode = #tpu.pipeline_mode<synchronous>, transform_indices = @transform_6, window_bounds = array<i64: 32, 384>}, {pipeline_mode = #tpu.pipeline_mode<synchronous>, transform_indices = @transform_7, window_bounds = array<i64: 64, 384>}, {pipeline_mode = #tpu.pipeline_mode<synchronous>, transform_indices = @transform_8, window_bounds = array<i64: 1, 384>}, {pipeline_mode = #tpu.pipeline_mode<synchronous>, transform_indices = @transform_9, window_bounds = array<i64: 1, 384>}, {transform_indices = @transform_10, window_bounds = array<i64: 128, 128>}, {transform_indices = @transform_11, window_bounds = array<i64: 64, 128>}, {transform_indices = @transform_12, window_bounds = array<i64: 32, 128>}, {transform_indices = @transform_13, window_bounds = array<i64: 1, 128>}, {transform_indices = @transform_14, window_bounds = array<i64: 8, 128>}, {transform_indices = @transform_15, window_bounds = array<i64: 8, 128>}]} {
    %c0_i32 = arith.constant 0 : i32
    %0 = arith.cmpi eq, %arg1, %c0_i32 : i32
    %1 = arith.extui %0 : i1 to i32
    %c0_i32_0 = arith.constant 0 : i32
    %2 = arith.cmpi ne, %1, %c0_i32_0 : i32
    scf.if %2 {
      %c0_18 = arith.constant 0 : index
      %c0_19 = arith.constant 0 : index
      %19 = vector.load %arg2[%c0_18, %c0_19] : memref<8x32xf32, #tpu.memory_space<vmem>>, vector<8x32xf32>
      %c0_20 = arith.constant 0 : index
      %c0_21 = arith.constant 0 : index
      %20 = vector.load %arg3[%c0_20, %c0_21] : memref<8x128xf32, #tpu.memory_space<vmem>>, vector<8x128xf32>
      %c0_22 = arith.constant 0 : index
      %c0_23 = arith.constant 0 : index
      %c0_24 = arith.constant 0 : index
      %21 = vector.load %arg4[%c0_22, %c0_23, %c0_24] : memref<8x8x64xbf16, #tpu.memory_space<vmem>>, vector<8x8x64xbf16>
      %22 = arith.truncf %20 : vector<8x128xf32> to vector<8x128xbf16>
      %c0_25 = arith.constant 0 : index
      %c0_26 = arith.constant 0 : index
      %23 = vector.load %arg5[%c0_25, %c0_26] : memref<128x512xbf16, #tpu.memory_space<vmem>>, vector<128x512xbf16>
      %cst_27 = arith.constant dense<0.000000e+00> : vector<8x512xf32>
      %24 = tpu.matmul %22, %23, %cst_27 {dimension_numbers = #tpu.dot_dimension_numbers<[1], [0], [0], [1], [0, 0, 1, 1], [], []>} : vector<8x128xbf16>, vector<128x512xbf16>, vector<8x512xf32> -> vector<8x512xf32>
      %25 = vector.extract_strided_slice %24 {offsets = [0, 0], sizes = [8, 128], strides = [1, 1]} : vector<8x512xf32> to vector<8x128xf32>
      %26 = vector.extract_strided_slice %24 {offsets = [0, 128], sizes = [8, 384], strides = [1, 1]} : vector<8x512xf32> to vector<8x384xf32>
      %c0_28 = arith.constant 0 : index
      %c0_29 = arith.constant 0 : index
      %27 = vector.load %arg11[%c0_28, %c0_29] : memref<1x384xf32, #tpu.memory_space<vmem>>, vector<1x384xf32>
      %28 = vector.broadcast %27 : vector<1x384xf32> to vector<8x384xf32>
      %29 = arith.addf %26, %28 : vector<8x384xf32>
      %30 = vector.shape_cast %21 : vector<8x8x64xbf16> to vector<64x64xbf16>
      %c0_30 = arith.constant 0 : index
      %c0_31 = arith.constant 0 : index
      %31 = vector.load %arg6[%c0_30, %c0_31] : memref<64x128xbf16, #tpu.memory_space<vmem>>, vector<64x128xbf16>
      %cst_32 = arith.constant dense<0.000000e+00> : vector<64x128xf32>
      %32 = tpu.matmul %30, %31, %cst_32 {dimension_numbers = #tpu.dot_dimension_numbers<[1], [0], [0], [1], [0, 0, 1, 1], [], []>} : vector<64x64xbf16>, vector<64x128xbf16>, vector<64x128xf32> -> vector<64x128xf32>
      %33 = vector.shape_cast %32 : vector<64x128xf32> to vector<8x8x128xf32>
      %34 = vector.shape_cast %25 : vector<8x128xf32> to vector<1x8x128xf32>
      %35 = vector.broadcast %34 : vector<1x8x128xf32> to vector<8x8x128xf32>
      %36 = arith.addf %33, %35 : vector<8x8x128xf32>
      %37 = math.tanh %36 : vector<8x8x128xf32>
      %c0_33 = arith.constant 0 : index
      %c0_34 = arith.constant 0 : index
      %38 = vector.load %arg7[%c0_33, %c0_34] : memref<1x128xf32, #tpu.memory_space<vmem>>, vector<1x128xf32>
      %39 = vector.shape_cast %38 : vector<1x128xf32> to vector<1x1x128xf32>
      %40 = vector.broadcast %39 : vector<1x1x128xf32> to vector<8x8x128xf32>
      %41 = arith.mulf %37, %40 : vector<8x8x128xf32>
      %cst_35 = arith.constant dense<0.000000e+00> : vector<8x8xf32>
      %42 = vector.multi_reduction <add>, %41, %cst_35 [2] : vector<8x8x128xf32> to vector<8x8xf32>
      %43 = vector.shape_cast %42 : vector<8x8xf32> to vector<8x8x1xf32>
      %cst_36 = arith.constant dense<0xFF800000> : vector<8x1xf32>
      %44 = vector.multi_reduction <maximumf>, %43, %cst_36 [0] : vector<8x8x1xf32> to vector<8x1xf32>
      %45 = vector.shape_cast %44 : vector<8x1xf32> to vector<1x8x1xf32>
      %46 = vector.broadcast %45 : vector<1x8x1xf32> to vector<8x8x1xf32>
      %47 = arith.subf %43, %46 : vector<8x8x1xf32>
      %48 = math.exp %47 : vector<8x8x1xf32>
      %cst_37 = arith.constant dense<0.000000e+00> : vector<8x1xf32>
      %49 = vector.multi_reduction <add>, %48, %cst_37 [0] : vector<8x8x1xf32> to vector<8x1xf32>
      %50 = vector.shape_cast %49 : vector<8x1xf32> to vector<1x8x1xf32>
      %51 = tpu.reciprocal %50 {approx = true} : vector<1x8x1xf32> -> vector<1x8x1xf32>
      %52 = vector.broadcast %51 : vector<1x8x1xf32> to vector<8x8x1xf32>
      %53 = arith.mulf %48, %52 : vector<8x8x1xf32>
      %54 = arith.extf %21 : vector<8x8x64xbf16> to vector<8x8x64xf32>
      %55 = vector.broadcast %53 : vector<8x8x1xf32> to vector<8x8x64xf32>
      %56 = arith.mulf %55, %54 : vector<8x8x64xf32>
      %cst_38 = arith.constant dense<0.000000e+00> : vector<8x64xf32>
      %57 = vector.multi_reduction <add>, %56, %cst_38 [0] : vector<8x8x64xf32> to vector<8x64xf32>
      %58 = arith.truncf %19 : vector<8x32xf32> to vector<8x32xbf16>
      %59 = arith.truncf %57 : vector<8x64xf32> to vector<8x64xbf16>
      %c0_39 = arith.constant 0 : index
      %c0_40 = arith.constant 0 : index
      %60 = vector.load %arg8[%c0_39, %c0_40] : memref<32x384xbf16, #tpu.memory_space<vmem>>, vector<32x384xbf16>
      %cst_41 = arith.constant dense<0.000000e+00> : vector<8x384xf32>
      %61 = tpu.matmul %58, %60, %cst_41 {dimension_numbers = #tpu.dot_dimension_numbers<[1], [0], [0], [1], [0, 0, 1, 1], [], []>} : vector<8x32xbf16>, vector<32x384xbf16>, vector<8x384xf32> -> vector<8x384xf32>
      %c0_42 = arith.constant 0 : index
      %c0_43 = arith.constant 0 : index
      %62 = vector.load %arg9[%c0_42, %c0_43] : memref<64x384xbf16, #tpu.memory_space<vmem>>, vector<64x384xbf16>
      %cst_44 = arith.constant dense<0.000000e+00> : vector<8x384xf32>
      %63 = tpu.matmul %59, %62, %cst_44 {dimension_numbers = #tpu.dot_dimension_numbers<[1], [0], [0], [1], [0, 0, 1, 1], [], []>} : vector<8x64xbf16>, vector<64x384xbf16>, vector<8x384xf32> -> vector<8x384xf32>
      %64 = arith.addf %61, %63 : vector<8x384xf32>
      %c0_45 = arith.constant 0 : index
      %c0_46 = arith.constant 0 : index
      %65 = vector.load %arg10[%c0_45, %c0_46] : memref<1x384xf32, #tpu.memory_space<vmem>>, vector<1x384xf32>
      %66 = vector.broadcast %65 : vector<1x384xf32> to vector<8x384xf32>
      %67 = arith.addf %64, %66 : vector<8x384xf32>
      %68 = vector.extract_strided_slice %67 {offsets = [0, 0], sizes = [8, 128], strides = [1, 1]} : vector<8x384xf32> to vector<8x128xf32>
      %69 = vector.extract_strided_slice %29 {offsets = [0, 0], sizes = [8, 128], strides = [1, 1]} : vector<8x384xf32> to vector<8x128xf32>
      %70 = arith.addf %68, %69 : vector<8x128xf32>
      %71 = arith.negf %70 : vector<8x128xf32>
      %72 = math.exp %71 : vector<8x128xf32>
      %cst_47 = arith.constant 1.000000e+00 : f32
      %73 = vector.broadcast %cst_47 : f32 to vector<8x128xf32>
      %74 = arith.addf %73, %72 : vector<8x128xf32>
      %75 = arith.divf %73, %74 : vector<8x128xf32>
      %76 = vector.extract_strided_slice %67 {offsets = [0, 128], sizes = [8, 128], strides = [1, 1]} : vector<8x384xf32> to vector<8x128xf32>
      %77 = vector.extract_strided_slice %29 {offsets = [0, 128], sizes = [8, 128], strides = [1, 1]} : vector<8x384xf32> to vector<8x128xf32>
      %78 = arith.addf %76, %77 : vector<8x128xf32>
      %79 = arith.negf %78 : vector<8x128xf32>
      %80 = math.exp %79 : vector<8x128xf32>
      %cst_48 = arith.constant 1.000000e+00 : f32
      %81 = vector.broadcast %cst_48 : f32 to vector<8x128xf32>
      %82 = arith.addf %81, %80 : vector<8x128xf32>
      %83 = arith.divf %81, %82 : vector<8x128xf32>
      %84 = vector.extract_strided_slice %67 {offsets = [0, 256], sizes = [8, 128], strides = [1, 1]} : vector<8x384xf32> to vector<8x128xf32>
      %85 = vector.extract_strided_slice %29 {offsets = [0, 256], sizes = [8, 128], strides = [1, 1]} : vector<8x384xf32> to vector<8x128xf32>
      %86 = arith.mulf %75, %85 : vector<8x128xf32>
      %87 = arith.addf %84, %86 : vector<8x128xf32>
      %88 = math.tanh %87 : vector<8x128xf32>
      %cst_49 = arith.constant 1.000000e+00 : f32
      %89 = vector.broadcast %cst_49 : f32 to vector<8x128xf32>
      %90 = arith.subf %89, %83 : vector<8x128xf32>
      %91 = arith.mulf %90, %88 : vector<8x128xf32>
      %92 = arith.mulf %83, %20 : vector<8x128xf32>
      %93 = arith.addf %91, %92 : vector<8x128xf32>
      %c0_50 = arith.constant 0 : index
      %c0_51 = arith.constant 0 : index
      %94 = vector.load %arg17[%c0_50, %c0_51] : memref<8x128xf32, #tpu.memory_space<vmem>>, vector<8x128xf32>
      tpu.vector_store %arg17[%c0_50, %c0_51], %93 {strides = array<i32>} : memref<8x128xf32, #tpu.memory_space<vmem>>, vector<8x128xf32>,
      %95 = arith.truncf %93 : vector<8x128xf32> to vector<8x128xbf16>
      %c0_52 = arith.constant 0 : index
      %c0_53 = arith.constant 0 : index
      %96 = vector.load %arg18[%c0_52, %c0_53] : memref<8x128xbf16, #tpu.memory_space<vmem>>, vector<8x128xbf16>
      tpu.vector_store %arg18[%c0_52, %c0_53], %95 {strides = array<i32>} : memref<8x128xbf16, #tpu.memory_space<vmem>>, vector<8x128xbf16>,
      %c0_54 = arith.constant 0 : index
      %c0_55 = arith.constant 0 : index
      %97 = vector.load %arg19[%c0_54, %c0_55] : memref<8x64xbf16, #tpu.memory_space<vmem>>, vector<8x64xbf16>
      tpu.vector_store %arg19[%c0_54, %c0_55], %59 {strides = array<i32>} : memref<8x64xbf16, #tpu.memory_space<vmem>>, vector<8x64xbf16>,
    } else {
    }
    %c0 = arith.constant 0 : index
    %c0_1 = arith.constant 0 : index
    %3 = vector.load %arg18[%c0, %c0_1] : memref<8x128xbf16, #tpu.memory_space<vmem>>, vector<8x128xbf16>
    %c0_2 = arith.constant 0 : index
    %c0_3 = arith.constant 0 : index
    %4 = vector.load %arg12[%c0_2, %c0_3] : memref<128x128xbf16, #tpu.memory_space<vmem>>, vector<128x128xbf16>
    %cst = arith.constant dense<0.000000e+00> : vector<8x128xf32>
    %5 = tpu.matmul %3, %4, %cst {dimension_numbers = #tpu.dot_dimension_numbers<[1], [0], [0], [1], [0, 0, 1, 1], [], []>} : vector<8x128xbf16>, vector<128x128xbf16>, vector<8x128xf32> -> vector<8x128xf32>
    %c0_4 = arith.constant 0 : index
    %c0_5 = arith.constant 0 : index
    %6 = vector.load %arg19[%c0_4, %c0_5] : memref<8x64xbf16, #tpu.memory_space<vmem>>, vector<8x64xbf16>
    %c0_6 = arith.constant 0 : index
    %c0_7 = arith.constant 0 : index
    %7 = vector.load %arg13[%c0_6, %c0_7] : memref<64x128xbf16, #tpu.memory_space<vmem>>, vector<64x128xbf16>
    %cst_8 = arith.constant dense<0.000000e+00> : vector<8x128xf32>
    %8 = tpu.matmul %6, %7, %cst_8 {dimension_numbers = #tpu.dot_dimension_numbers<[1], [0], [0], [1], [0, 0, 1, 1], [], []>} : vector<8x64xbf16>, vector<64x128xbf16>, vector<8x128xf32> -> vector<8x128xf32>
    %9 = arith.addf %5, %8 : vector<8x128xf32>
    %c0_9 = arith.constant 0 : index
    %c0_10 = arith.constant 0 : index
    %10 = vector.load %arg2[%c0_9, %c0_10] : memref<8x32xf32, #tpu.memory_space<vmem>>, vector<8x32xf32>
    %11 = arith.truncf %10 : vector<8x32xf32> to vector<8x32xbf16>
    %c0_11 = arith.constant 0 : index
    %c0_12 = arith.constant 0 : index
    %12 = vector.load %arg14[%c0_11, %c0_12] : memref<32x128xbf16, #tpu.memory_space<vmem>>, vector<32x128xbf16>
    %cst_13 = arith.constant dense<0.000000e+00> : vector<8x128xf32>
    %13 = tpu.matmul %11, %12, %cst_13 {dimension_numbers = #tpu.dot_dimension_numbers<[1], [0], [0], [1], [0, 0, 1, 1], [], []>} : vector<8x32xbf16>, vector<32x128xbf16>, vector<8x128xf32> -> vector<8x128xf32>
    %14 = arith.addf %9, %13 : vector<8x128xf32>
    %c0_14 = arith.constant 0 : index
    %c0_15 = arith.constant 0 : index
    %15 = vector.load %arg15[%c0_14, %c0_15] : memref<1x128xf32, #tpu.memory_space<vmem>>, vector<1x128xf32>
    %16 = vector.broadcast %15 : vector<1x128xf32> to vector<8x128xf32>
    %17 = arith.addf %14, %16 : vector<8x128xf32>
    %c0_16 = arith.constant 0 : index
    %c0_17 = arith.constant 0 : index
    %18 = vector.load %arg16[%c0_16, %c0_17] : memref<8x128xf32, #tpu.memory_space<vmem>>, vector<8x128xf32>
    tpu.vector_store %arg16[%c0_16, %c0_17], %17 {strides = array<i32>} : memref<8x128xf32, #tpu.memory_space<vmem>>, vector<8x128xf32>,
    return
  }
  func.func @transform_0(%arg0: i32, %arg1: i32) -> (i32, i32) {
    %c0_i32 = arith.constant 0 : i32
    %c0_i32_0 = arith.constant 0 : i32
    return %arg0, %c0_i32 : i32, i32
  }
  func.func @transform_1(%arg0: i32, %arg1: i32) -> (i32, i32) {
    %c0_i32 = arith.constant 0 : i32
    %c0_i32_0 = arith.constant 0 : i32
    return %arg0, %c0_i32 : i32, i32
  }
  func.func @transform_2(%arg0: i32, %arg1: i32) -> (i32, i32, i32) {
    %c0_i32 = arith.constant 0 : i32
    %c0_i32_0 = arith.constant 0 : i32
    %c0_i32_1 = arith.constant 0 : i32
    return %c0_i32, %arg0, %c0_i32_0 : i32, i32, i32
  }
  func.func @transform_3(%arg0: i32, %arg1: i32) -> (i32, i32) {
    %c0_i32 = arith.constant 0 : i32
    %c0_i32_0 = arith.constant 0 : i32
    %c0_i32_1 = arith.constant 0 : i32
    return %c0_i32, %c0_i32_0 : i32, i32
  }
  func.func @transform_4(%arg0: i32, %arg1: i32) -> (i32, i32) {
    %c0_i32 = arith.constant 0 : i32
    %c0_i32_0 = arith.constant 0 : i32
    %c0_i32_1 = arith.constant 0 : i32
    return %c0_i32, %c0_i32_0 : i32, i32
  }
  func.func @transform_5(%arg0: i32, %arg1: i32) -> (i32, i32) {
    %c0_i32 = arith.constant 0 : i32
    %c0_i32_0 = arith.constant 0 : i32
    %c0_i32_1 = arith.constant 0 : i32
    return %c0_i32, %c0_i32_0 : i32, i32
  }
  func.func @transform_6(%arg0: i32, %arg1: i32) -> (i32, i32) {
    %c0_i32 = arith.constant 0 : i32
    %c0_i32_0 = arith.constant 0 : i32
    %c0_i32_1 = arith.constant 0 : i32
    return %c0_i32, %c0_i32_0 : i32, i32
  }
  func.func @transform_7(%arg0: i32, %arg1: i32) -> (i32, i32) {
    %c0_i32 = arith.constant 0 : i32
    %c0_i32_0 = arith.constant 0 : i32
    %c0_i32_1 = arith.constant 0 : i32
    return %c0_i32, %c0_i32_0 : i32, i32
  }
  func.func @transform_8(%arg0: i32, %arg1: i32) -> (i32, i32) {
    %c0_i32 = arith.constant 0 : i32
    %c0_i32_0 = arith.constant 0 : i32
    %c0_i32_1 = arith.constant 0 : i32
    return %c0_i32, %c0_i32_0 : i32, i32
  }
  func.func @transform_9(%arg0: i32, %arg1: i32) -> (i32, i32) {
    %c0_i32 = arith.constant 0 : i32
    %c0_i32_0 = arith.constant 0 : i32
    %c0_i32_1 = arith.constant 0 : i32
    return %c0_i32, %c0_i32_0 : i32, i32
  }
  func.func @transform_10(%arg0: i32, %arg1: i32) -> (i32, i32) {
    %c0_i32 = arith.constant 0 : i32
    %c0_i32_0 = arith.constant 0 : i32
    return %c0_i32, %arg1 : i32, i32
  }
  func.func @transform_11(%arg0: i32, %arg1: i32) -> (i32, i32) {
    %c0_i32 = arith.constant 0 : i32
    %c0_i32_0 = arith.constant 0 : i32
    return %c0_i32, %arg1 : i32, i32
  }
  func.func @transform_12(%arg0: i32, %arg1: i32) -> (i32, i32) {
    %c0_i32 = arith.constant 0 : i32
    %c0_i32_0 = arith.constant 0 : i32
    return %c0_i32, %arg1 : i32, i32
  }
  func.func @transform_13(%arg0: i32, %arg1: i32) -> (i32, i32) {
    %c0_i32 = arith.constant 0 : i32
    %c0_i32_0 = arith.constant 0 : i32
    return %c0_i32, %arg1 : i32, i32
  }
  func.func @transform_14(%arg0: i32, %arg1: i32) -> (i32, i32) {
    %c0_i32 = arith.constant 0 : i32
    return %arg0, %arg1 : i32, i32
  }
  func.func @transform_15(%arg0: i32, %arg1: i32) -> (i32, i32) {
    %c0_i32 = arith.constant 0 : i32
    %c0_i32_0 = arith.constant 0 : i32
    return %arg0, %c0_i32 : i32, i32
  }
}

module attributes {stable_mosaic.version = 11 : i64} {
  func.func @decoder_kernel(%arg0: i32, %arg1: i32, %arg2: memref<8x32xf32, #tpu.memory_space<vmem>>, %arg3: memref<8x128xf32, #tpu.memory_space<vmem>>, %arg4: memref<8x8x64xbf16, #tpu.memory_space<vmem>>, %arg5: memref<128x512xbf16, #tpu.memory_space<vmem>>, %arg6: memref<64x128xbf16, #tpu.memory_space<vmem>>, %arg7: memref<1x128xf32, #tpu.memory_space<vmem>>, %arg8: memref<32x384xbf16, #tpu.memory_space<vmem>>, %arg9: memref<64x384xbf16, #tpu.memory_space<vmem>>, %arg10: memref<1x384xf32, #tpu.memory_space<vmem>>, %arg11: memref<1x384xf32, #tpu.memory_space<vmem>>, %arg12: memref<128x128xbf16, #tpu.memory_space<vmem>>, %arg13: memref<64x128xbf16, #tpu.memory_space<vmem>>, %arg14: memref<32x128xbf16, #tpu.memory_space<vmem>>, %arg15: memref<1x128xf32, #tpu.memory_space<vmem>>, %arg16: memref<8x128xf32, #tpu.memory_space<vmem>>, %arg17: memref<8x128xf32, #tpu.memory_space<vmem>>, %arg18: memref<8x128xbf16, #tpu.memory_space<vmem>>, %arg19: memref<8x64xbf16, #tpu.memory_space<vmem>>) attributes {dimension_semantics = [#tpu.dimension_semantics<parallel>, #tpu.dimension_semantics<arbitrary>], iteration_bounds = array<i64: 1, 1>, scalar_prefetch = 0 : i64, scratch_operands = 2 : i64, tpu.core_type = #tpu.core_type<tc>, window_params = [{transform_indices = @transform_0, window_bounds = array<i64: 8, 32>}, {transform_indices = @transform_1, window_bounds = array<i64: 8, 128>}, {transform_indices = @transform_2, window_bounds = array<i64: 8, 8, 64>}, {pipeline_mode = #tpu.pipeline_mode<synchronous>, transform_indices = @transform_3, window_bounds = array<i64: 128, 512>}, {pipeline_mode = #tpu.pipeline_mode<synchronous>, transform_indices = @transform_4, window_bounds = array<i64: 64, 128>}, {pipeline_mode = #tpu.pipeline_mode<synchronous>, transform_indices = @transform_5, window_bounds = array<i64: 1, 128>}, {pipeline_mode = #tpu.pipeline_mode<synchronous>, transform_indices = @transform_6, window_bounds = array<i64: 32, 384>}, {pipeline_mode = #tpu.pipeline_mode<synchronous>, transform_indices = @transform_7, window_bounds = array<i64: 64, 384>}, {pipeline_mode = #tpu.pipeline_mode<synchronous>, transform_indices = @transform_8, window_bounds = array<i64: 1, 384>}, {pipeline_mode = #tpu.pipeline_mode<synchronous>, transform_indices = @transform_9, window_bounds = array<i64: 1, 384>}, {transform_indices = @transform_10, window_bounds = array<i64: 128, 128>}, {transform_indices = @transform_11, window_bounds = array<i64: 64, 128>}, {transform_indices = @transform_12, window_bounds = array<i64: 32, 128>}, {transform_indices = @transform_13, window_bounds = array<i64: 1, 128>}, {transform_indices = @transform_14, window_bounds = array<i64: 8, 128>}, {transform_indices = @transform_15, window_bounds = array<i64: 8, 128>}]} {
    %c0_i32 = arith.constant 0 : i32
    %0 = arith.cmpi eq, %arg1, %c0_i32 : i32
    %1 = arith.extui %0 : i1 to i32
    %c0_i32_0 = arith.constant 0 : i32
    %2 = arith.cmpi ne, %1, %c0_i32_0 : i32
    scf.if %2 {
      %c0_18 = arith.constant 0 : index
      %c0_19 = arith.constant 0 : index
      %19 = vector.load %arg2[%c0_18, %c0_19] : memref<8x32xf32, #tpu.memory_space<vmem>>, vector<8x32xf32>
      %c0_20 = arith.constant 0 : index
      %c0_21 = arith.constant 0 : index
      %20 = vector.load %arg3[%c0_20, %c0_21] : memref<8x128xf32, #tpu.memory_space<vmem>>, vector<8x128xf32>
      %c0_22 = arith.constant 0 : index
      %c0_23 = arith.constant 0 : index
      %c0_24 = arith.constant 0 : index
      %21 = vector.load %arg4[%c0_22, %c0_23, %c0_24] : memref<8x8x64xbf16, #tpu.memory_space<vmem>>, vector<8x8x64xbf16>
      %22 = arith.truncf %20 : vector<8x128xf32> to vector<8x128xbf16>
      %c0_25 = arith.constant 0 : index
      %c0_26 = arith.constant 0 : index
      %23 = vector.load %arg5[%c0_25, %c0_26] : memref<128x512xbf16, #tpu.memory_space<vmem>>, vector<128x512xbf16>
      %cst_27 = arith.constant dense<0.000000e+00> : vector<8x512xf32>
      %24 = tpu.matmul %22, %23, %cst_27 {dimension_numbers = #tpu.dot_dimension_numbers<[1], [0], [0], [1], [0, 0, 1, 1], [], []>} : vector<8x128xbf16>, vector<128x512xbf16>, vector<8x512xf32> -> vector<8x512xf32>
      %25 = vector.extract_strided_slice %24 {offsets = [0, 0], sizes = [8, 128], strides = [1, 1]} : vector<8x512xf32> to vector<8x128xf32>
      %26 = vector.extract_strided_slice %24 {offsets = [0, 128], sizes = [8, 384], strides = [1, 1]} : vector<8x512xf32> to vector<8x384xf32>
      %c0_28 = arith.constant 0 : index
      %c0_29 = arith.constant 0 : index
      %27 = vector.load %arg11[%c0_28, %c0_29] : memref<1x384xf32, #tpu.memory_space<vmem>>, vector<1x384xf32>
      %28 = vector.broadcast %27 : vector<1x384xf32> to vector<8x384xf32>
      %29 = arith.addf %26, %28 : vector<8x384xf32>
      %30 = vector.shape_cast %21 : vector<8x8x64xbf16> to vector<64x64xbf16>
      %c0_30 = arith.constant 0 : index
      %c0_31 = arith.constant 0 : index
      %31 = vector.load %arg6[%c0_30, %c0_31] : memref<64x128xbf16, #tpu.memory_space<vmem>>, vector<64x128xbf16>
      %cst_32 = arith.constant dense<0.000000e+00> : vector<64x128xf32>
      %32 = tpu.matmul %30, %31, %cst_32 {dimension_numbers = #tpu.dot_dimension_numbers<[1], [0], [0], [1], [0, 0, 1, 1], [], []>} : vector<64x64xbf16>, vector<64x128xbf16>, vector<64x128xf32> -> vector<64x128xf32>
      %33 = vector.shape_cast %32 : vector<64x128xf32> to vector<8x8x128xf32>
      %34 = vector.shape_cast %25 : vector<8x128xf32> to vector<1x8x128xf32>
      %35 = vector.broadcast %34 : vector<1x8x128xf32> to vector<8x8x128xf32>
      %36 = arith.addf %33, %35 : vector<8x8x128xf32>
      %37 = math.tanh %36 : vector<8x8x128xf32>
      %c0_33 = arith.constant 0 : index
      %c0_34 = arith.constant 0 : index
      %38 = vector.load %arg7[%c0_33, %c0_34] : memref<1x128xf32, #tpu.memory_space<vmem>>, vector<1x128xf32>
      %39 = vector.shape_cast %38 : vector<1x128xf32> to vector<1x1x128xf32>
      %40 = vector.broadcast %39 : vector<1x1x128xf32> to vector<8x8x128xf32>
      %41 = arith.mulf %37, %40 : vector<8x8x128xf32>
      %cst_35 = arith.constant dense<0.000000e+00> : vector<8x8xf32>
      %42 = vector.multi_reduction <add>, %41, %cst_35 [2] : vector<8x8x128xf32> to vector<8x8xf32>
      %43 = vector.shape_cast %42 : vector<8x8xf32> to vector<8x8x1xf32>
      %cst_36 = arith.constant dense<0xFF800000> : vector<8x1xf32>
      %44 = vector.multi_reduction <maximumf>, %43, %cst_36 [0] : vector<8x8x1xf32> to vector<8x1xf32>
      %45 = vector.shape_cast %44 : vector<8x1xf32> to vector<1x8x1xf32>
      %46 = vector.broadcast %45 : vector<1x8x1xf32> to vector<8x8x1xf32>
      %47 = arith.subf %43, %46 : vector<8x8x1xf32>
      %48 = math.exp %47 : vector<8x8x1xf32>
      %cst_37 = arith.constant dense<0.000000e+00> : vector<8x1xf32>
      %49 = vector.multi_reduction <add>, %48, %cst_37 [0] : vector<8x8x1xf32> to vector<8x1xf32>
      %50 = vector.shape_cast %49 : vector<8x1xf32> to vector<1x8x1xf32>
      %51 = tpu.reciprocal %50 {approx = true} : vector<1x8x1xf32> -> vector<1x8x1xf32>
      %52 = vector.broadcast %51 : vector<1x8x1xf32> to vector<8x8x1xf32>
      %53 = arith.mulf %48, %52 : vector<8x8x1xf32>
      %54 = arith.extf %21 : vector<8x8x64xbf16> to vector<8x8x64xf32>
      %55 = vector.broadcast %53 : vector<8x8x1xf32> to vector<8x8x64xf32>
      %56 = arith.mulf %55, %54 : vector<8x8x64xf32>
      %cst_38 = arith.constant dense<0.000000e+00> : vector<8x64xf32>
      %57 = vector.multi_reduction <add>, %56, %cst_38 [0] : vector<8x8x64xf32> to vector<8x64xf32>
      %58 = arith.truncf %19 : vector<8x32xf32> to vector<8x32xbf16>
      %59 = arith.truncf %57 : vector<8x64xf32> to vector<8x64xbf16>
      %c0_39 = arith.constant 0 : index
      %c0_40 = arith.constant 0 : index
      %60 = vector.load %arg8[%c0_39, %c0_40] : memref<32x384xbf16, #tpu.memory_space<vmem>>, vector<32x384xbf16>
      %cst_41 = arith.constant dense<0.000000e+00> : vector<8x384xf32>
      %61 = tpu.matmul %58, %60, %cst_41 {dimension_numbers = #tpu.dot_dimension_numbers<[1], [0], [0], [1], [0, 0, 1, 1], [], []>} : vector<8x32xbf16>, vector<32x384xbf16>, vector<8x384xf32> -> vector<8x384xf32>
      %c0_42 = arith.constant 0 : index
      %c0_43 = arith.constant 0 : index
      %62 = vector.load %arg9[%c0_42, %c0_43] : memref<64x384xbf16, #tpu.memory_space<vmem>>, vector<64x384xbf16>
      %cst_44 = arith.constant dense<0.000000e+00> : vector<8x384xf32>
      %63 = tpu.matmul %59, %62, %cst_44 {dimension_numbers = #tpu.dot_dimension_numbers<[1], [0], [0], [1], [0, 0, 1, 1], [], []>} : vector<8x64xbf16>, vector<64x384xbf16>, vector<8x384xf32> -> vector<8x384xf32>
      %64 = arith.addf %61, %63 : vector<8x384xf32>
      %c0_45 = arith.constant 0 : index
      %c0_46 = arith.constant 0 : index
      %65 = vector.load %arg10[%c0_45, %c0_46] : memref<1x384xf32, #tpu.memory_space<vmem>>, vector<1x384xf32>
      %66 = vector.broadcast %65 : vector<1x384xf32> to vector<8x384xf32>
      %67 = arith.addf %64, %66 : vector<8x384xf32>
      %68 = vector.extract_strided_slice %67 {offsets = [0, 0], sizes = [8, 128], strides = [1, 1]} : vector<8x384xf32> to vector<8x128xf32>
      %69 = vector.extract_strided_slice %29 {offsets = [0, 0], sizes = [8, 128], strides = [1, 1]} : vector<8x384xf32> to vector<8x128xf32>
      %70 = arith.addf %68, %69 : vector<8x128xf32>
      %71 = arith.negf %70 : vector<8x128xf32>
      %72 = math.exp %71 : vector<8x128xf32>
      %cst_47 = arith.constant 1.000000e+00 : f32
      %73 = vector.broadcast %cst_47 : f32 to vector<8x128xf32>
      %74 = arith.addf %73, %72 : vector<8x128xf32>
      %75 = arith.divf %73, %74 : vector<8x128xf32>
      %76 = vector.extract_strided_slice %67 {offsets = [0, 128], sizes = [8, 128], strides = [1, 1]} : vector<8x384xf32> to vector<8x128xf32>
      %77 = vector.extract_strided_slice %29 {offsets = [0, 128], sizes = [8, 128], strides = [1, 1]} : vector<8x384xf32> to vector<8x128xf32>
      %78 = arith.addf %76, %77 : vector<8x128xf32>
      %79 = arith.negf %78 : vector<8x128xf32>
      %80 = math.exp %79 : vector<8x128xf32>
      %cst_48 = arith.constant 1.000000e+00 : f32
      %81 = vector.broadcast %cst_48 : f32 to vector<8x128xf32>
      %82 = arith.addf %81, %80 : vector<8x128xf32>
      %83 = arith.divf %81, %82 : vector<8x128xf32>
      %84 = vector.extract_strided_slice %67 {offsets = [0, 256], sizes = [8, 128], strides = [1, 1]} : vector<8x384xf32> to vector<8x128xf32>
      %85 = vector.extract_strided_slice %29 {offsets = [0, 256], sizes = [8, 128], strides = [1, 1]} : vector<8x384xf32> to vector<8x128xf32>
      %86 = arith.mulf %75, %85 : vector<8x128xf32>
      %87 = arith.addf %84, %86 : vector<8x128xf32>
      %88 = math.tanh %87 : vector<8x128xf32>
      %cst_49 = arith.constant 1.000000e+00 : f32
      %89 = vector.broadcast %cst_49 : f32 to vector<8x128xf32>
      %90 = arith.subf %89, %83 : vector<8x128xf32>
      %91 = arith.mulf %90, %88 : vector<8x128xf32>
      %92 = arith.mulf %83, %20 : vector<8x128xf32>
      %93 = arith.addf %91, %92 : vector<8x128xf32>
      %c0_50 = arith.constant 0 : index
      %c0_51 = arith.constant 0 : index
      %94 = vector.load %arg17[%c0_50, %c0_51] : memref<8x128xf32, #tpu.memory_space<vmem>>, vector<8x128xf32>
      tpu.vector_store %arg17[%c0_50, %c0_51], %93 {strides = array<i32>} : memref<8x128xf32, #tpu.memory_space<vmem>>, vector<8x128xf32>,
      %95 = arith.truncf %93 : vector<8x128xf32> to vector<8x128xbf16>
      %c0_52 = arith.constant 0 : index
      %c0_53 = arith.constant 0 : index
      %96 = vector.load %arg18[%c0_52, %c0_53] : memref<8x128xbf16, #tpu.memory_space<vmem>>, vector<8x128xbf16>
      tpu.vector_store %arg18[%c0_52, %c0_53], %95 {strides = array<i32>} : memref<8x128xbf16, #tpu.memory_space<vmem>>, vector<8x128xbf16>,
      %c0_54 = arith.constant 0 : index
      %c0_55 = arith.constant 0 : index
      %97 = vector.load %arg19[%c0_54, %c0_55] : memref<8x64xbf16, #tpu.memory_space<vmem>>, vector<8x64xbf16>
      tpu.vector_store %arg19[%c0_54, %c0_55], %59 {strides = array<i32>} : memref<8x64xbf16, #tpu.memory_space<vmem>>, vector<8x64xbf16>,
    } else {
    }
    %c0 = arith.constant 0 : index
    %c0_1 = arith.constant 0 : index
    %3 = vector.load %arg18[%c0, %c0_1] : memref<8x128xbf16, #tpu.memory_space<vmem>>, vector<8x128xbf16>
    %c0_2 = arith.constant 0 : index
    %c0_3 = arith.constant 0 : index
    %4 = vector.load %arg12[%c0_2, %c0_3] : memref<128x128xbf16, #tpu.memory_space<vmem>>, vector<128x128xbf16>
    %cst = arith.constant dense<0.000000e+00> : vector<8x128xf32>
    %5 = tpu.matmul %3, %4, %cst {dimension_numbers = #tpu.dot_dimension_numbers<[1], [0], [0], [1], [0, 0, 1, 1], [], []>} : vector<8x128xbf16>, vector<128x128xbf16>, vector<8x128xf32> -> vector<8x128xf32>
    %c0_4 = arith.constant 0 : index
    %c0_5 = arith.constant 0 : index
    %6 = vector.load %arg19[%c0_4, %c0_5] : memref<8x64xbf16, #tpu.memory_space<vmem>>, vector<8x64xbf16>
    %c0_6 = arith.constant 0 : index
    %c0_7 = arith.constant 0 : index
    %7 = vector.load %arg13[%c0_6, %c0_7] : memref<64x128xbf16, #tpu.memory_space<vmem>>, vector<64x128xbf16>
    %cst_8 = arith.constant dense<0.000000e+00> : vector<8x128xf32>
    %8 = tpu.matmul %6, %7, %cst_8 {dimension_numbers = #tpu.dot_dimension_numbers<[1], [0], [0], [1], [0, 0, 1, 1], [], []>} : vector<8x64xbf16>, vector<64x128xbf16>, vector<8x128xf32> -> vector<8x128xf32>
    %9 = arith.addf %5, %8 : vector<8x128xf32>
    %c0_9 = arith.constant 0 : index
    %c0_10 = arith.constant 0 : index
    %10 = vector.load %arg2[%c0_9, %c0_10] : memref<8x32xf32, #tpu.memory_space<vmem>>, vector<8x32xf32>
    %11 = arith.truncf %10 : vector<8x32xf32> to vector<8x32xbf16>
    %c0_11 = arith.constant 0 : index
    %c0_12 = arith.constant 0 : index
    %12 = vector.load %arg14[%c0_11, %c0_12] : memref<32x128xbf16, #tpu.memory_space<vmem>>, vector<32x128xbf16>
    %cst_13 = arith.constant dense<0.000000e+00> : vector<8x128xf32>
    %13 = tpu.matmul %11, %12, %cst_13 {dimension_numbers = #tpu.dot_dimension_numbers<[1], [0], [0], [1], [0, 0, 1, 1], [], []>} : vector<8x32xbf16>, vector<32x128xbf16>, vector<8x128xf32> -> vector<8x128xf32>
    %14 = arith.addf %9, %13 : vector<8x128xf32>
    %c0_14 = arith.constant 0 : index
    %c0_15 = arith.constant 0 : index
    %15 = vector.load %arg15[%c0_14, %c0_15] : memref<1x128xf32, #tpu.memory_space<vmem>>, vector<1x128xf32>
    %16 = vector.broadcast %15 : vector<1x128xf32> to vector<8x128xf32>
    %17 = arith.addf %14, %16 : vector<8x128xf32>
    %c0_16 = arith.constant 0 : index
    %c0_17 = arith.constant 0 : index
    %18 = vector.load %arg16[%c0_16, %c0_17] : memref<8x128xf32, #tpu.memory_space<vmem>>, vector<8x128xf32>
    tpu.vector_store %arg16[%c0_16, %c0_17], %17 {strides = array<i32>} : memref<8x128xf32, #tpu.memory_space<vmem>>, vector<8x128xf32>,
    return
  }
  func.func @transform_0(%arg0: i32, %arg1: i32) -> (i32, i32) {
    %c0_i32 = arith.constant 0 : i32
    %c0_i32_0 = arith.constant 0 : i32
    return %arg0, %c0_i32 : i32, i32
  }
  func.func @transform_1(%arg0: i32, %arg1: i32) -> (i32, i32) {
    %c0_i32 = arith.constant 0 : i32
    %c0_i32_0 = arith.constant 0 : i32
    return %arg0, %c0_i32 : i32, i32
  }
  func.func @transform_2(%arg0: i32, %arg1: i32) -> (i32, i32, i32) {
    %c0_i32 = arith.constant 0 : i32
    %c0_i32_0 = arith.constant 0 : i32
    %c0_i32_1 = arith.constant 0 : i32
    return %c0_i32, %arg0, %c0_i32_0 : i32, i32, i32
  }
  func.func @transform_3(%arg0: i32, %arg1: i32) -> (i32, i32) {
    %c0_i32 = arith.constant 0 : i32
    %c0_i32_0 = arith.constant 0 : i32
    %c0_i32_1 = arith.constant 0 : i32
    return %c0_i32, %c0_i32_0 : i32, i32
  }
  func.func @transform_4(%arg0: i32, %arg1: i32) -> (i32, i32) {
    %c0_i32 = arith.constant 0 : i32
    %c0_i32_0 = arith.constant 0 : i32
    %c0_i32_1 = arith.constant 0 : i32
    return %c0_i32, %c0_i32_0 : i32, i32
  }
  func.func @transform_5(%arg0: i32, %arg1: i32) -> (i32, i32) {
    %c0_i32 = arith.constant 0 : i32
    %c0_i32_0 = arith.constant 0 : i32
    %c0_i32_1 = arith.constant 0 : i32
    return %c0_i32, %c0_i32_0 : i32, i32
  }
  func.func @transform_6(%arg0: i32, %arg1: i32) -> (i32, i32) {
    %c0_i32 = arith.constant 0 : i32
    %c0_i32_0 = arith.constant 0 : i32
    %c0_i32_1 = arith.constant 0 : i32
    return %c0_i32, %c0_i32_0 : i32, i32
  }
  func.func @transform_7(%arg0: i32, %arg1: i32) -> (i32, i32) {
    %c0_i32 = arith.constant 0 : i32
    %c0_i32_0 = arith.constant 0 : i32
    %c0_i32_1 = arith.constant 0 : i32
    return %c0_i32, %c0_i32_0 : i32, i32
  }
  func.func @transform_8(%arg0: i32, %arg1: i32) -> (i32, i32) {
    %c0_i32 = arith.constant 0 : i32
    %c0_i32_0 = arith.constant 0 : i32
    %c0_i32_1 = arith.constant 0 : i32
    return %c0_i32, %c0_i32_0 : i32, i32
  }
  func.func @transform_9(%arg0: i32, %arg1: i32) -> (i32, i32) {
    %c0_i32 = arith.constant 0 : i32
    %c0_i32_0 = arith.constant 0 : i32
    %c0_i32_1 = arith.constant 0 : i32
    return %c0_i32, %c0_i32_0 : i32, i32
  }
  func.func @transform_10(%arg0: i32, %arg1: i32) -> (i32, i32) {
    %c0_i32 = arith.constant 0 : i32
    %c0_i32_0 = arith.constant 0 : i32
    return %c0_i32, %arg1 : i32, i32
  }
  func.func @transform_11(%arg0: i32, %arg1: i32) -> (i32, i32) {
    %c0_i32 = arith.constant 0 : i32
    %c0_i32_0 = arith.constant 0 : i32
    return %c0_i32, %arg1 : i32, i32
  }
  func.func @transform_12(%arg0: i32, %arg1: i32) -> (i32, i32) {
    %c0_i32 = arith.constant 0 : i32
    %c0_i32_0 = arith.constant 0 : i32
    return %c0_i32, %arg1 : i32, i32
  }
  func.func @transform_13(%arg0: i32, %arg1: i32) -> (i32, i32) {
    %c0_i32 = arith.constant 0 : i32
    %c0_i32_0 = arith.constant 0 : i32
    return %c0_i32, %arg1 : i32, i32
  }
  func.func @transform_14(%arg0: i32, %arg1: i32) -> (i32, i32) {
    %c0_i32 = arith.constant 0 : i32
    return %arg0, %arg1 : i32, i32
  }
  func.func @transform_15(%arg0: i32, %arg1: i32) -> (i32, i32) {
    %c0_i32 = arith.constant 0 : i32
    %c0_i32_0 = arith.constant 0 : i32
    return %arg0, %c0_i32 : i32, i32
  }
}

</mosaic_0001>

<llo_original>
// kernel: tpu_custom_call.1
$region0: #{tpu_custom_call.1}
  #allocation0 [shape = 'u32[]', space=smem, size = 0x4, offset = 0x4, fixed_abs, tag = 'smem constant byte address 0x4 - core index']
  #allocation1 [shape = 'u32[72,128]{1,0:T(1,128)}', space=vmem, size = 0x9000, scoped, tag = 'internal scratch']
  #allocation2 [shape = 'bf16[8,128]{1,0:T(8,128)(2,1)}', space=vmem, size = 0x800, scoped, tag = 'scratch operand']
  #allocation3 [shape = 'bf16[8,64]{1,0:T(8,128)(2,1)}', space=vmem, size = 0x800, scoped, tag = 'scratch operand']
  %s0 = inlined_call_operand.hbm [shape: f32[8,32], index: 0, kind: input, shape index: {}]
  %s1 = inlined_call_operand.hbm [shape: f32[8,128], index: 1, kind: input, shape index: {}]
  %s2 = inlined_call_operand.hbm [shape: bf16[8,8,64], index: 2, kind: input, shape index: {}]
  %s3 = inlined_call_operand.hbm [shape: bf16[128,512], index: 3, kind: input, shape index: {}]
  %s4 = inlined_call_operand.hbm [shape: bf16[64,128], index: 4, kind: input, shape index: {}]
  %s5 = inlined_call_operand.hbm [shape: f32[1,128], index: 5, kind: input, shape index: {}]
  %s6 = inlined_call_operand.hbm [shape: bf16[32,384], index: 6, kind: input, shape index: {}]
  %s7 = inlined_call_operand.hbm [shape: bf16[64,384], index: 7, kind: input, shape index: {}]
  %s8 = inlined_call_operand.vmem [shape: f32[1,384], index: 8, kind: input, shape index: {}]
  %s9 = inlined_call_operand.vmem [shape: f32[1,384], index: 9, kind: input, shape index: {}]
  %s10 = inlined_call_operand.hbm [shape: bf16[128,128], index: 10, kind: input, shape index: {}]
  %s11 = inlined_call_operand.hbm [shape: bf16[64,128], index: 11, kind: input, shape index: {}]
  %s12 = inlined_call_operand.hbm [shape: bf16[32,128], index: 12, kind: input, shape index: {}]
  %s13 = inlined_call_operand.vmem [shape: f32[1,128], index: 13, kind: input, shape index: {}]
  %s14 = inlined_call_operand.hbm [shape: f32[8,128], index: 14, kind: output, shape index: {0}]
  %s15 = inlined_call_operand.hbm [shape: f32[8,128], index: 15, kind: output, shape index: {1}]
  %16 = xla_tuple %s14, %s15
  %s17 = sld [smem:[#allocation0]]
  $region122: #{tpu_custom_call.1} parent=0
    _
  %s19 = ssub.s32 1, %s17
  %s20 = scalar_select 0, %s19, %s17
  $region1: #{tpu_custom_call.1} parent=0
    #allocation4 [shape = 'u8[4096]{0}', space=vmem, size = 0x1000, scoped, tag = 'input window, operand 0, single buffered']
    #allocation5 [shape = 's32[1]{0}', space=sflag, size = 0x4, scoped, tag = 'scoped memory for tpu_custom_call.1']
    #allocation6 [shape = 's32[1]{0}', space=sflag, size = 0x4, scoped, tag = 'scoped memory for tpu_custom_call.1']
    #allocation7 [shape = 'u8[4096]{0}', space=vmem, size = 0x1000, scoped, tag = 'input window, operand 1, single buffered']
    #allocation8 [shape = 's32[1]{0}', space=sflag, size = 0x4, scoped, tag = 'scoped memory for tpu_custom_call.1']
    #allocation9 [shape = 'u8[16384]{0}', space=vmem, size = 0x4000, scoped, tag = 'input window, operand 2, single buffered']
    #allocation10 [shape = 'u8[131072]{0}', space=vmem, size = 0x20000, scoped, tag = 'input window, operand 3, single buffered']
    #allocation11 [shape = 's32[1]{0}', space=sflag, size = 0x4, scoped, tag = 'scoped memory for tpu_custom_call.1']
    #allocation12 [shape = 'u8[16384]{0}', space=vmem, size = 0x4000, scoped, tag = 'input window, operand 4, single buffered']
    #allocation13 [shape = 'u8[512]{0}', space=vmem, size = 0x400, scoped, tag = 'input window, operand 5, single buffered']
    #allocation14 [shape = 's32[1]{0}', space=sflag, size = 0x4, scoped, tag = 'scoped memory for tpu_custom_call.1']
    #allocation15 [shape = 'u8[24576]{0}', space=vmem, size = 0x6000, scoped, tag = 'input window, operand 6, single buffered']
    #allocation16 [shape = 'u8[49152]{0}', space=vmem, size = 0xc000, scoped, tag = 'input window, operand 7, single buffered']
    #allocation17 [shape = 's32[1]{0}', space=sflag, size = 0x4, scoped, tag = 'scoped memory for tpu_custom_call.1']
    #allocation18 [shape = 'u8[32768]{0}', space=vmem, size = 0x8000, scoped, tag = 'input window, operand 10, single buffered']
    #allocation19 [shape = 'u8[16384]{0}', space=vmem, size = 0x4000, scoped, tag = 'input window, operand 11, single buffered']
    #allocation20 [shape = 's32[1]{0}', space=sflag, size = 0x4, scoped, tag = 'scoped memory for tpu_custom_call.1']
    #allocation21 [shape = 'u8[8192]{0}', space=vmem, size = 0x2000, scoped, tag = 'input window, operand 12, single buffered']
    #allocation22 [shape = 'u8[4096]{0}', space=vmem, size = 0x1000, scoped, tag = 'output window, operand 0, single buffered']
    #allocation23 [shape = 'u8[4096]{0}', space=vmem, size = 0x1000, scoped, tag = 'output window, operand 1, single buffered']
    #allocation24 [shape = 's32[1]{0}', space=sflag, size = 0x4, scoped, tag = 'scoped memory for tpu_custom_call.1']
    %21 = vsyncpa [#allocation5], 0
    %22 = vsyncpa [#allocation8], 0
    %23 = vsyncpa [#allocation11], 0
    %24 = vsyncpa [#allocation14], 0
    %25 = vsyncpa [#allocation17], 0
    %26 = vsyncpa [#allocation20], 0
    %27 = vsyncpa [#allocation6], 0
    %28 = vsyncpa [#allocation24], 0
    // Predicated region
    $region2: #{tpu_custom_call.1} parent=1 // pred_check
      _
    $region3: #{tpu_custom_call.1} parent=1 // pred_check_branch
      %30 = sbr.rel (0) target = $region5
    $region4: #{tpu_custom_call.1} parent=1 // pred_region
      %32 = vsyncadd [#allocation5], 0
      %s34 = sshll.u32 %s0, 4
      %s35 = int_to_ptr.hbm [resolvable:$true] %s34
      %s36 = sshll.u32 [#allocation4], 4
      %s37 = int_to_ptr.vmem [resolvable:$true] %s36
      %39 = dma.hbm_to_vmem [thread:$0]  %s35, 128, %s37, [#allocation5]
    $region5: #{tpu_custom_call.1} parent=1 // pred_fallthru
      _
    // Predicated region
    $region6: #{tpu_custom_call.1} parent=1 // pred_check
      _
    $region7: #{tpu_custom_call.1} parent=1 // pred_check_branch
      %41 = sbr.rel (0) target = $region9
    $region8: #{tpu_custom_call.1} parent=1 // pred_region
      %43 = vsyncadd [#allocation8], 0
      %s45 = sshll.u32 %s1, 4
      %s46 = int_to_ptr.hbm [resolvable:$true] %s45
      %s47 = sshll.u32 [#allocation7], 4
      %s48 = int_to_ptr.vmem [resolvable:$true] %s47
      %50 = dma.hbm_to_vmem [thread:$0]  %s46, 128, %s48, [#allocation8]
    $region9: #{tpu_custom_call.1} parent=1 // pred_fallthru
      _
    // Predicated region
    $region10: #{tpu_custom_call.1} parent=1 // pred_check
      _
    $region11: #{tpu_custom_call.1} parent=1 // pred_check_branch
      %52 = sbr.rel (0) target = $region13
    $region12: #{tpu_custom_call.1} parent=1 // pred_region
      %54 = vsyncadd [#allocation8], 0
      %s55 = sshll.u32 %s2, 4
      %s56 = int_to_ptr.hbm [resolvable:$true] %s55
      %s57 = sshll.u32 [#allocation9], 4
      %s58 = int_to_ptr.vmem [resolvable:$true] %s57
      %63 = dma.hbm_to_vmem [thread:$0]  %s56, 512, %s58, [#allocation8], 64, 64, 4
    $region13: #{tpu_custom_call.1} parent=1 // pred_fallthru
      _
    // Predicated region
    $region14: #{tpu_custom_call.1} parent=1 // pred_check
      _
    $region15: #{tpu_custom_call.1} parent=1 // pred_check_branch
      %65 = sbr.rel (0) target = $region17
    $region16: #{tpu_custom_call.1} parent=1 // pred_region
      %67 = vsyncadd [#allocation11], 0
      %s68 = sshll.u32 %s3, 4
      %s69 = int_to_ptr.hbm [resolvable:$true] %s68
      %s70 = sshll.u32 [#allocation10], 4
      %s71 = int_to_ptr.vmem [resolvable:$true] %s70
      %76 = dma.hbm_to_vmem [thread:$0]  %s69, 4096, %s71, [#allocation11], 256, 256, 16
    $region17: #{tpu_custom_call.1} parent=1 // pred_fallthru
      _
    // Predicated region
    $region18: #{tpu_custom_call.1} parent=1 // pred_check
      _
    $region19: #{tpu_custom_call.1} parent=1 // pred_check_branch
      %78 = sbr.rel (0) target = $region21
    $region20: #{tpu_custom_call.1} parent=1 // pred_region
      %80 = vsyncadd [#allocation11], 0
      %s81 = sshll.u32 %s4, 4
      %s82 = int_to_ptr.hbm [resolvable:$true] %s81
      %s83 = sshll.u32 [#allocation12], 4
      %s84 = int_to_ptr.vmem [resolvable:$true] %s83
      %89 = dma.hbm_to_vmem [thread:$0]  %s82, 512, %s84, [#allocation11], 64, 64, 4
    $region21: #{tpu_custom_call.1} parent=1 // pred_fallthru
      _
    // Predicated region
    $region22: #{tpu_custom_call.1} parent=1 // pred_check
      _
    $region23: #{tpu_custom_call.1} parent=1 // pred_check_branch
      %91 = sbr.rel (0) target = $region25
    $region24: #{tpu_custom_call.1} parent=1 // pred_region
      %93 = vsyncadd [#allocation14], 0
      %s95 = sshll.u32 %s5, 4
      %s96 = int_to_ptr.hbm [resolvable:$true] %s95
      %s97 = sshll.u32 [#allocation13], 4
      %s98 = int_to_ptr.vmem [resolvable:$true] %s97
      %100 = dma.hbm_to_vmem [thread:$0]  %s96, 16, %s98, [#allocation14]
    $region25: #{tpu_custom_call.1} parent=1 // pred_fallthru
      _
    // Predicated region
    $region26: #{tpu_custom_call.1} parent=1 // pred_check
      _
    $region27: #{tpu_custom_call.1} parent=1 // pred_check_branch
      %102 = sbr.rel (0) target = $region29
    $region28: #{tpu_custom_call.1} parent=1 // pred_region
      %104 = vsyncadd [#allocation14], 0
      %s105 = sshll.u32 %s6, 4
      %s106 = int_to_ptr.hbm [resolvable:$true] %s105
      %s107 = sshll.u32 [#allocation15], 4
      %s108 = int_to_ptr.vmem [resolvable:$true] %s107
      %113 = dma.hbm_to_vmem [thread:$0]  %s106, 768, %s108, [#allocation14], 192, 192, 12
    $region29: #{tpu_custom_call.1} parent=1 // pred_fallthru
      _
    // Predicated region
    $region30: #{tpu_custom_call.1} parent=1 // pred_check
      _
    $region31: #{tpu_custom_call.1} parent=1 // pred_check_branch
      %115 = sbr.rel (0) target = $region33
    $region32: #{tpu_custom_call.1} parent=1 // pred_region
      %117 = vsyncadd [#allocation17], 0
      %s118 = sshll.u32 %s7, 4
      %s119 = int_to_ptr.hbm [resolvable:$true] %s118
      %s120 = sshll.u32 [#allocation16], 4
      %s121 = int_to_ptr.vmem [resolvable:$true] %s120
      %126 = dma.hbm_to_vmem [thread:$0]  %s119, 1536, %s121, [#allocation17], 192, 192, 12
    $region33: #{tpu_custom_call.1} parent=1 // pred_fallthru
      _
    // Predicated region
    $region34: #{tpu_custom_call.1} parent=1 // pred_check
      _
    $region35: #{tpu_custom_call.1} parent=1 // pred_check_branch
      %128 = sbr.rel (0) target = $region37
    $region36: #{tpu_custom_call.1} parent=1 // pred_region
      _
    $region37: #{tpu_custom_call.1} parent=1 // pred_fallthru
      _
    // Predicated region
    $region38: #{tpu_custom_call.1} parent=1 // pred_check
      _
    $region39: #{tpu_custom_call.1} parent=1 // pred_check_branch
      %130 = sbr.rel (0) target = $region41
    $region40: #{tpu_custom_call.1} parent=1 // pred_region
      _
    $region41: #{tpu_custom_call.1} parent=1 // pred_fallthru
      _
    // Predicated region
    $region42: #{tpu_custom_call.1} parent=1 // pred_check
      _
    $region43: #{tpu_custom_call.1} parent=1 // pred_check_branch
      %132 = sbr.rel (0) target = $region45
    $region44: #{tpu_custom_call.1} parent=1 // pred_region
      %134 = vsyncadd [#allocation17], 0
      %s135 = sshll.u32 %s10, 4
      %s136 = int_to_ptr.hbm [resolvable:$true] %s135
      %s137 = sshll.u32 [#allocation18], 4
      %s138 = int_to_ptr.vmem [resolvable:$true] %s137
      %143 = dma.hbm_to_vmem [thread:$0]  %s136, 1024, %s138, [#allocation17], 64, 64, 4
    $region45: #{tpu_custom_call.1} parent=1 // pred_fallthru
      _
    // Predicated region
    $region46: #{tpu_custom_call.1} parent=1 // pred_check
      _
    $region47: #{tpu_custom_call.1} parent=1 // pred_check_branch
      %145 = sbr.rel (0) target = $region49
    $region48: #{tpu_custom_call.1} parent=1 // pred_region
      %147 = vsyncadd [#allocation20], 0
      %s148 = sshll.u32 %s11, 4
      %s149 = int_to_ptr.hbm [resolvable:$true] %s148
      %s150 = sshll.u32 [#allocation19], 4
      %s151 = int_to_ptr.vmem [resolvable:$true] %s150
      %156 = dma.hbm_to_vmem [thread:$0]  %s149, 512, %s151, [#allocation20], 64, 64, 4
    $region49: #{tpu_custom_call.1} parent=1 // pred_fallthru
      _
    // Predicated region
    $region50: #{tpu_custom_call.1} parent=1 // pred_check
      _
    $region51: #{tpu_custom_call.1} parent=1 // pred_check_branch
      %158 = sbr.rel (0) target = $region53
    $region52: #{tpu_custom_call.1} parent=1 // pred_region
      %160 = vsyncadd [#allocation20], 0
      %s161 = sshll.u32 %s12, 4
      %s162 = int_to_ptr.hbm [resolvable:$true] %s161
      %s163 = sshll.u32 [#allocation21], 4
      %s164 = int_to_ptr.vmem [resolvable:$true] %s163
      %169 = dma.hbm_to_vmem [thread:$0]  %s162, 256, %s164, [#allocation20], 64, 64, 4
    $region53: #{tpu_custom_call.1} parent=1 // pred_fallthru
      _
    // Predicated region
    $region54: #{tpu_custom_call.1} parent=1 // pred_check
      _
    $region55: #{tpu_custom_call.1} parent=1 // pred_check_branch
      %171 = sbr.rel (0) target = $region57
    $region56: #{tpu_custom_call.1} parent=1 // pred_region
      _
    $region57: #{tpu_custom_call.1} parent=1 // pred_fallthru
      _
    // Predicated region
    $region58: #{tpu_custom_call.1} parent=1 // pred_check
      _
    $region59: #{tpu_custom_call.1} parent=1 // pred_check_branch
      %173 = sbr.rel (0) target = $region61
    $region60: #{tpu_custom_call.1} parent=1 // pred_region
      %175 = dma.done [#allocation5], 128
    $region61: #{tpu_custom_call.1} parent=1 // pred_fallthru
      _
    // Predicated region
    $region62: #{tpu_custom_call.1} parent=1 // pred_check
      _
    $region63: #{tpu_custom_call.1} parent=1 // pred_check_branch
      %177 = sbr.rel (0) target = $region65
    $region64: #{tpu_custom_call.1} parent=1 // pred_region
      %179 = dma.done [#allocation8], 128
    $region65: #{tpu_custom_call.1} parent=1 // pred_fallthru
      _
    // Predicated region
    $region66: #{tpu_custom_call.1} parent=1 // pred_check
      _
    $region67: #{tpu_custom_call.1} parent=1 // pred_check_branch
      %181 = sbr.rel (0) target = $region69
    $region68: #{tpu_custom_call.1} parent=1 // pred_region
      %183 = dma.done [#allocation8], 512
    $region69: #{tpu_custom_call.1} parent=1 // pred_fallthru
      _
    // Predicated region
    $region70: #{tpu_custom_call.1} parent=1 // pred_check
      _
    $region71: #{tpu_custom_call.1} parent=1 // pred_check_branch
      %185 = sbr.rel (0) target = $region73
    $region72: #{tpu_custom_call.1} parent=1 // pred_region
      %187 = dma.done [#allocation11], 4096
    $region73: #{tpu_custom_call.1} parent=1 // pred_fallthru
      _
    // Predicated region
    $region74: #{tpu_custom_call.1} parent=1 // pred_check
      _
    $region75: #{tpu_custom_call.1} parent=1 // pred_check_branch
      %189 = sbr.rel (0) target = $region77
    $region76: #{tpu_custom_call.1} parent=1 // pred_region
      %191 = dma.done [#allocation11], 512
    $region77: #{tpu_custom_call.1} parent=1 // pred_fallthru
      _
    // Predicated region
    $region78: #{tpu_custom_call.1} parent=1 // pred_check
      _
    $region79: #{tpu_custom_call.1} parent=1 // pred_check_branch
      %193 = sbr.rel (0) target = $region81
    $region80: #{tpu_custom_call.1} parent=1 // pred_region
      %195 = dma.done [#allocation14], 16
    $region81: #{tpu_custom_call.1} parent=1 // pred_fallthru
      _
    // Predicated region
    $region82: #{tpu_custom_call.1} parent=1 // pred_check
      _
    $region83: #{tpu_custom_call.1} parent=1 // pred_check_branch
      %197 = sbr.rel (0) target = $region85
    $region84: #{tpu_custom_call.1} parent=1 // pred_region
      %199 = dma.done [#allocation14], 768
    $region85: #{tpu_custom_call.1} parent=1 // pred_fallthru
      _
    // Predicated region
    $region86: #{tpu_custom_call.1} parent=1 // pred_check
      _
    $region87: #{tpu_custom_call.1} parent=1 // pred_check_branch
      %201 = sbr.rel (0) target = $region89
    $region88: #{tpu_custom_call.1} parent=1 // pred_region
      %203 = dma.done [#allocation17], 1536
    $region89: #{tpu_custom_call.1} parent=1 // pred_fallthru
      _
    // Predicated region
    $region90: #{tpu_custom_call.1} parent=1 // pred_check
      _
    $region91: #{tpu_custom_call.1} parent=1 // pred_check_branch
      %205 = sbr.rel (0) target = $region93
    $region92: #{tpu_custom_call.1} parent=1 // pred_region
      %207 = dma.done [#allocation17], 1024
    $region93: #{tpu_custom_call.1} parent=1 // pred_fallthru
      _
    // Predicated region
    $region94: #{tpu_custom_call.1} parent=1 // pred_check
      _
    $region95: #{tpu_custom_call.1} parent=1 // pred_check_branch
      %209 = sbr.rel (0) target = $region97
    $region96: #{tpu_custom_call.1} parent=1 // pred_region
      %211 = dma.done [#allocation20], 512
    $region97: #{tpu_custom_call.1} parent=1 // pred_fallthru
      _
    // Predicated region
    $region98: #{tpu_custom_call.1} parent=1 // pred_check
      _
    $region99: #{tpu_custom_call.1} parent=1 // pred_check_branch
      %213 = sbr.rel (0) target = $region101
    $region100: #{tpu_custom_call.1} parent=1 // pred_region
      %215 = dma.done [#allocation20], 256
    $region101: #{tpu_custom_call.1} parent=1 // pred_fallthru
      _
    %p217 = scmp.eq.s32.totalorder 0, 0
    // Predicated region
    $region102: #{tpu_custom_call.1} parent=1 // pred_check
      %p218 = pneg %p217
    $region103: #{tpu_custom_call.1} parent=1 // pred_check_branch
      %220 = sbr.rel (%p218) target = $region105
    $region104: #{tpu_custom_call.1} parent=1 // pred_region
      %v221 = vld [vmem:[#allocation4] sm:$0xff]
      %v222 = vld [vmem:[#allocation7] sm:$0xff]
      %v223 = vld [vmem:[#allocation9] sm:$0xf]
      %v224 = vld [vmem:[#allocation9 + $0x4] sm:$0xf]
      %v225 = vld [vmem:[#allocation9 + $0x8] sm:$0xf]
      %v226 = vld [vmem:[#allocation9 + $0xc] sm:$0xf]
      %v227 = vld [vmem:[#allocation9 + $0x10] sm:$0xf]
      %v228 = vld [vmem:[#allocation9 + $0x14] sm:$0xf]
      %v229 = vld [vmem:[#allocation9 + $0x18] sm:$0xf]
      %v230 = vld [vmem:[#allocation9 + $0x1c] sm:$0xf]
      %v231 = vpack.c.bf16 %v222, %v222
      %v232 = vld [vmem:[#allocation10] sm:$0xff]
      %v233 = vld [vmem:[#allocation10 + $0x8] sm:$0xff]
      %v234 = vld [vmem:[#allocation10 + $0x10] sm:$0xff]
      %v235 = vld [vmem:[#allocation10 + $0x18] sm:$0xff]
      %v236 = vld [vmem:[#allocation10 + $0x20] sm:$0xff]
      %v237 = vld [vmem:[#allocation10 + $0x28] sm:$0xff]
      %v238 = vld [vmem:[#allocation10 + $0x30] sm:$0xff]
      %v239 = vld [vmem:[#allocation10 + $0x38] sm:$0xff]
      %v240 = vld [vmem:[#allocation10 + $0x40] sm:$0xff]
      %v241 = vld [vmem:[#allocation10 + $0x48] sm:$0xff]
      %v242 = vld [vmem:[#allocation10 + $0x50] sm:$0xff]
      %v243 = vld [vmem:[#allocation10 + $0x58] sm:$0xff]
      %v244 = vld [vmem:[#allocation10 + $0x60] sm:$0xff]
      %v245 = vld [vmem:[#allocation10 + $0x68] sm:$0xff]
      %v246 = vld [vmem:[#allocation10 + $0x70] sm:$0xff]
      %v247 = vld [vmem:[#allocation10 + $0x78] sm:$0xff]
      %v248 = vld [vmem:[#allocation10 + $0x80] sm:$0xff]
      %v249 = vld [vmem:[#allocation10 + $0x88] sm:$0xff]
      %v250 = vld [vmem:[#allocation10 + $0x90] sm:$0xff]
      %v251 = vld [vmem:[#allocation10 + $0x98] sm:$0xff]
      %v252 = vld [vmem:[#allocation10 + $0xa0] sm:$0xff]
      %v253 = vld [vmem:[#allocation10 + $0xa8] sm:$0xff]
      %v254 = vld [vmem:[#allocation10 + $0xb0] sm:$0xff]
      %v255 = vld [vmem:[#allocation10 + $0xb8] sm:$0xff]
      %v256 = vld [vmem:[#allocation10 + $0xc0] sm:$0xff]
      %v257 = vld [vmem:[#allocation10 + $0xc8] sm:$0xff]
      %v258 = vld [vmem:[#allocation10 + $0xd0] sm:$0xff]
      %v259 = vld [vmem:[#allocation10 + $0xd8] sm:$0xff]
      %v260 = vld [vmem:[#allocation10 + $0xe0] sm:$0xff]
      %v261 = vld [vmem:[#allocation10 + $0xe8] sm:$0xff]
      %v262 = vld [vmem:[#allocation10 + $0xf0] sm:$0xff]
      %v263 = vld [vmem:[#allocation10 + $0xf8] sm:$0xff]
      %v296 = vunpack.c.l.b16 %v232
      %v297 = vunpack.c.h.b16 %v232
      %v298 = vunpack.c.l.b16 %v233
      %v299 = vunpack.c.h.b16 %v233
      %v300 = vunpack.c.l.b16 %v234
      %v301 = vunpack.c.h.b16 %v234
      %v302 = vunpack.c.l.b16 %v235
      %v303 = vunpack.c.h.b16 %v235
      %v304 = vunpack.c.l.b16 %v236
      %v305 = vunpack.c.h.b16 %v236
      %v306 = vunpack.c.l.b16 %v237
      %v307 = vunpack.c.h.b16 %v237
      %v308 = vunpack.c.l.b16 %v238
      %v309 = vunpack.c.h.b16 %v238
      %v310 = vunpack.c.l.b16 %v239
      %v311 = vunpack.c.h.b16 %v239
      %v312 = vunpack.c.l.b16 %v240
      %v313 = vunpack.c.h.b16 %v240
      %v314 = vunpack.c.l.b16 %v241
      %v315 = vunpack.c.h.b16 %v241
      %v316 = vunpack.c.l.b16 %v242
      %v317 = vunpack.c.h.b16 %v242
      %v318 = vunpack.c.l.b16 %v243
      %v319 = vunpack.c.h.b16 %v243
      %v320 = vunpack.c.l.b16 %v244
      %v321 = vunpack.c.h.b16 %v244
      %v322 = vunpack.c.l.b16 %v245
      %v323 = vunpack.c.h.b16 %v245
      %v324 = vunpack.c.l.b16 %v246
      %v325 = vunpack.c.h.b16 %v246
      %v326 = vunpack.c.l.b16 %v247
      %v327 = vunpack.c.h.b16 %v247
      %v328 = vunpack.c.l.b16 %v248
      %v329 = vunpack.c.h.b16 %v248
      %v330 = vunpack.c.l.b16 %v249
      %v331 = vunpack.c.h.b16 %v249
      %v332 = vunpack.c.l.b16 %v250
      %v333 = vunpack.c.h.b16 %v250
      %v334 = vunpack.c.l.b16 %v251
      %v335 = vunpack.c.h.b16 %v251
      %v336 = vunpack.c.l.b16 %v252
      %v337 = vunpack.c.h.b16 %v252
      %v338 = vunpack.c.l.b16 %v253
      %v339 = vunpack.c.h.b16 %v253
      %v340 = vunpack.c.l.b16 %v254
      %v341 = vunpack.c.h.b16 %v254
      %v342 = vunpack.c.l.b16 %v255
      %v343 = vunpack.c.h.b16 %v255
      %v344 = vunpack.c.l.b16 %v256
      %v345 = vunpack.c.h.b16 %v256
      %v346 = vunpack.c.l.b16 %v257
      %v347 = vunpack.c.h.b16 %v257
      %v348 = vunpack.c.l.b16 %v258
      %v349 = vunpack.c.h.b16 %v258
      %v350 = vunpack.c.l.b16 %v259
      %v351 = vunpack.c.h.b16 %v259
      %v352 = vunpack.c.l.b16 %v260
      %v353 = vunpack.c.h.b16 %v260
      %v354 = vunpack.c.l.b16 %v261
      %v355 = vunpack.c.h.b16 %v261
      %v356 = vunpack.c.l.b16 %v262
      %v357 = vunpack.c.h.b16 %v262
      %v358 = vunpack.c.l.b16 %v263
      %v359 = vunpack.c.h.b16 %v263
      %v360 = vpack.c.b16 %v300, %v296
      %v361 = vpack.c.b16 %v301, %v297
      %v362 = vpack.c.b16 %v302, %v298
      %v363 = vpack.c.b16 %v303, %v299
      %v364 = vpack.c.b16 %v308, %v304
      %v365 = vpack.c.b16 %v309, %v305
      %v366 = vpack.c.b16 %v310, %v306
      %v367 = vpack.c.b16 %v311, %v307
      %v368 = vpack.c.b16 %v316, %v312
      %v369 = vpack.c.b16 %v317, %v313
      %v370 = vpack.c.b16 %v318, %v314
      %v371 = vpack.c.b16 %v319, %v315
      %v372 = vpack.c.b16 %v324, %v320
      %v373 = vpack.c.b16 %v325, %v321
      %v374 = vpack.c.b16 %v326, %v322
      %v375 = vpack.c.b16 %v327, %v323
      %v376 = vpack.c.b16 %v332, %v328
      %v377 = vpack.c.b16 %v333, %v329
      %v378 = vpack.c.b16 %v334, %v330
      %v379 = vpack.c.b16 %v335, %v331
      %v380 = vpack.c.b16 %v340, %v336
      %v381 = vpack.c.b16 %v341, %v337
      %v382 = vpack.c.b16 %v342, %v338
      %v383 = vpack.c.b16 %v343, %v339
      %v384 = vpack.c.b16 %v348, %v344
      %v385 = vpack.c.b16 %v349, %v345
      %v386 = vpack.c.b16 %v350, %v346
      %v387 = vpack.c.b16 %v351, %v347
      %v388 = vpack.c.b16 %v356, %v352
      %v389 = vpack.c.b16 %v357, %v353
      %v390 = vpack.c.b16 %v358, %v354
      %v391 = vpack.c.b16 %v359, %v355
      %424 = vmatpush.bf16.msra.mxu0 %v388
      %425 = vmatpush.bf16.msra.mxu0 %v384
      %426 = vmatpush.bf16.msra.mxu0 %v380
      %427 = vmatpush.bf16.msra.mxu0 %v376
      %428 = vmatpush.bf16.msra.mxu0 %v372
      %429 = vmatpush.bf16.msra.mxu0 %v368
      %430 = vmatpush.bf16.msra.mxu0 %v364
      %431 = vmatpush.bf16.msra.mxu0 %v360
      %432 = vmatmul.bf16.gmra.mxu0 %v231
      %v433 = vpop.f32.mrf.mxu0
      %v434 = vadd.f32 0.0, %v433
      %v435 = vpop.f32.mrf.mxu0
      %436 = vdwg.mxu0
      %437 = vmatpush.bf16.msra.mxu0 %v389
      %438 = vmatpush.bf16.msra.mxu0 %v385
      %439 = vmatpush.bf16.msra.mxu0 %v381
      %440 = vmatpush.bf16.msra.mxu0 %v377
      %441 = vmatpush.bf16.msra.mxu0 %v373
      %442 = vmatpush.bf16.msra.mxu0 %v369
      %443 = vmatpush.bf16.msra.mxu0 %v365
      %444 = vmatpush.bf16.msra.mxu0 %v361
      %445 = vmatmul.bf16.gmra.mxu0 %v231
      %v446 = vpop.f32.mrf.mxu0
      %v447 = vadd.f32 0.0, %v446
      %v448 = vpop.f32.mrf.mxu0
      %449 = vdwg.mxu0
      %450 = vmatpush.bf16.msra.mxu0 %v390
      %451 = vmatpush.bf16.msra.mxu0 %v386
      %452 = vmatpush.bf16.msra.mxu0 %v382
      %453 = vmatpush.bf16.msra.mxu0 %v378
      %454 = vmatpush.bf16.msra.mxu0 %v374
      %455 = vmatpush.bf16.msra.mxu0 %v370
      %456 = vmatpush.bf16.msra.mxu0 %v366
      %457 = vmatpush.bf16.msra.mxu0 %v362
      %458 = vmatmul.bf16.gmra.mxu0 %v231
      %v459 = vpop.f32.mrf.mxu0
      %v460 = vadd.f32 0.0, %v459
      %v461 = vpop.f32.mrf.mxu0
      %462 = vdwg.mxu0
      %463 = vmatpush.bf16.msra.mxu0 %v391
      %464 = vmatpush.bf16.msra.mxu0 %v387
      %465 = vmatpush.bf16.msra.mxu0 %v383
      %466 = vmatpush.bf16.msra.mxu0 %v379
      %467 = vmatpush.bf16.msra.mxu0 %v375
      %468 = vmatpush.bf16.msra.mxu0 %v371
      %469 = vmatpush.bf16.msra.mxu0 %v367
      %470 = vmatpush.bf16.msra.mxu0 %v363
      %471 = vmatmul.bf16.gmra.mxu0 %v231
      %v472 = vpop.f32.mrf.mxu0
      %v473 = vadd.f32 0.0, %v472
      %v474 = vpop.f32.mrf.mxu0
      %475 = vdwg.mxu0
      %v476 = vld [vmem:[%s9] sm:$0x7]
      %v478 = vperm.slane %v476, 0
      %v479 = vperm.slane %v476, 1
      %v480 = vperm.slane %v476, 2
      %v484 = vadd.f32 %v447, %v478
      %v485 = vadd.f32 %v460, %v479
      %v486 = vadd.f32 %v473, %v480
      %v487 = vld [vmem:[#allocation12] sm:$0xf]
      %v488 = vld [vmem:[#allocation12 + $0x4] sm:$0xf]
      %v489 = vld [vmem:[#allocation12 + $0x8] sm:$0xf]
      %v490 = vld [vmem:[#allocation12 + $0xc] sm:$0xf]
      %v491 = vld [vmem:[#allocation12 + $0x10] sm:$0xf]
      %v492 = vld [vmem:[#allocation12 + $0x14] sm:$0xf]
      %v493 = vld [vmem:[#allocation12 + $0x18] sm:$0xf]
      %v494 = vld [vmem:[#allocation12 + $0x1c] sm:$0xf]
      %v503 = vunpack.c.l.b16 %v223
      %v504 = vunpack.c.l.b16 %v224
      %v505 = vunpack.c.l.b16 %v225
      %v506 = vunpack.c.l.b16 %v226
      %v507 = vunpack.c.l.b16 %v227
      %v508 = vunpack.c.l.b16 %v228
      %v509 = vunpack.c.l.b16 %v229
      %v510 = vunpack.c.l.b16 %v230
      %v511 = vpack.c.b16 %v504, %v503
      %v512 = vpack.c.b16 %v506, %v505
      %v513 = vpack.c.b16 %v508, %v507
      %v514 = vpack.c.b16 %v510, %v509
      %v523 = vunpack.c.l.b16 %v487
      %v524 = vunpack.c.l.b16 %v488
      %v525 = vunpack.c.l.b16 %v489
      %v526 = vunpack.c.l.b16 %v490
      %v527 = vunpack.c.l.b16 %v491
      %v528 = vunpack.c.l.b16 %v492
      %v529 = vunpack.c.l.b16 %v493
      %v530 = vunpack.c.l.b16 %v494
      %v531 = vpack.c.b16 %v524, %v523
      %v532 = vpack.c.b16 %v526, %v525
      %v533 = vpack.c.b16 %v528, %v527
      %v534 = vpack.c.b16 %v530, %v529
      %vm539 = vcmask 523264
      %v541 = vsel %vm539, %v511, 0
      %v544 = vsel %vm539, %v512, 0
      %v547 = vsel %vm539, %v513, 0
      %v550 = vsel %vm539, %v514, 0
      %552 = vmatpush.bf16.msra.mxu0 0
      %553 = vmatpush.bf16.msra.mxu0 0
      %554 = vmatpush.bf16.msra.mxu0 0
      %555 = vmatpush.bf16.msra.mxu0 0
      %556 = vmatpush.bf16.msra.mxu0 %v534
      %557 = vmatpush.bf16.msra.mxu0 %v533
      %558 = vmatpush.bf16.msra.mxu0 %v532
      %559 = vmatpush.bf16.msra.mxu0 %v531
      %560 = vmatmul.bf16.gmra.mxu0 %v541
      %v561 = vpop.f32.mrf.mxu0
      %v562 = vadd.f32 0.0, %v561
      %v563 = vpop.f32.mrf.mxu0
      %v564 = vadd.f32 0.0, %v563
      %565 = vmatmul.bf16.gmra.mxu0 %v544
      %v566 = vpop.f32.mrf.mxu0
      %v567 = vadd.f32 0.0, %v566
      %v568 = vpop.f32.mrf.mxu0
      %v569 = vadd.f32 0.0, %v568
      %570 = vmatmul.bf16.gmra.mxu0 %v547
      %v571 = vpop.f32.mrf.mxu0
      %v572 = vadd.f32 0.0, %v571
      %v573 = vpop.f32.mrf.mxu0
      %v574 = vadd.f32 0.0, %v573
      %575 = vmatmul.bf16.gmra.mxu0 %v550
      %v576 = vpop.f32.mrf.mxu0
      %v577 = vadd.f32 0.0, %v576
      %v578 = vpop.f32.mrf.mxu0
      %v579 = vadd.f32 0.0, %v578
      %580 = vdwg.mxu0
      %v581 = vadd.f32 %v562, %v434
      %v582 = vadd.f32 %v564, %v434
      %v583 = vadd.f32 %v567, %v434
      %v584 = vadd.f32 %v569, %v434
      %v585 = vadd.f32 %v572, %v434
      %v586 = vadd.f32 %v574, %v434
      %v587 = vadd.f32 %v577, %v434
      %v588 = vadd.f32 %v579, %v434
      %v589 = vtanh.pop %v581
      %v590 = vtanh.pop %v582
      %v591 = vtanh.pop %v583
      %v592 = vtanh.pop %v584
      %v593 = vtanh.pop %v585
      %v594 = vtanh.pop %v586
      %v595 = vtanh.pop %v587
      %v596 = vtanh.pop %v588
      %v597 = vld [vmem:[#allocation13] sm:$0x1]
      %v599 = vperm.slane %v597, 0
      %v601 = vmul.f32 %v589, %v599
      %v602 = vmul.f32 %v590, %v599
      %v603 = vmul.f32 %v591, %v599
      %v604 = vmul.f32 %v592, %v599
      %v605 = vmul.f32 %v593, %v599
      %v606 = vmul.f32 %v594, %v599
      %v607 = vmul.f32 %v595, %v599
      %v608 = vmul.f32 %v596, %v599
      %609 = vadd.xlane.f32.xlu0 %v601
      %v610 = vpop.xlane.xlu0 %609
      %611 = vadd.xlane.f32.xlu0 %v602
      %v612 = vpop.xlane.xlu0 %611
      %613 = vadd.xlane.f32.xlu0 %v603
      %v614 = vpop.xlane.xlu0 %613
      %615 = vadd.xlane.f32.xlu0 %v604
      %v616 = vpop.xlane.xlu0 %615
      %617 = vadd.xlane.f32.xlu0 %v605
      %v618 = vpop.xlane.xlu0 %617
      %619 = vadd.xlane.f32.xlu0 %v606
      %v620 = vpop.xlane.xlu0 %619
      %621 = vadd.xlane.f32.xlu0 %v607
      %v622 = vpop.xlane.xlu0 %621
      %623 = vadd.xlane.f32.xlu0 %v608
      %v624 = vpop.xlane.xlu0 %623
      %v625 = vmax.f32 %v610, %v618
      %v626 = vmax.f32 %v612, %v620
      %v627 = vmax.f32 %v614, %v622
      %v628 = vmax.f32 %v616, %v624
      %v629 = vmax.f32 %v625, %v626
      %v630 = vmax.f32 %v627, %v628
      %v631 = vmax.f32 %v629, %v630
      %v632 = vsub.f32 %v610, %v631
      %v633 = vsub.f32 %v612, %v631
      %v634 = vsub.f32 %v614, %v631
      %v635 = vsub.f32 %v616, %v631
      %v636 = vsub.f32 %v618, %v631
      %v637 = vsub.f32 %v620, %v631
      %v638 = vsub.f32 %v622, %v631
      %v639 = vsub.f32 %v624, %v631
      %v640 = vmul.f32 %v632, 1.442695
      %v641 = vpow.pop %v640
      %v642 = vmul.f32 %v633, 1.442695
      %v643 = vpow.pop %v642
      %v644 = vmul.f32 %v634, 1.442695
      %v645 = vpow.pop %v644
      %v646 = vmul.f32 %v635, 1.442695
      %v647 = vpow.pop %v646
      %v648 = vmul.f32 %v636, 1.442695
      %v649 = vpow.pop %v648
      %v650 = vmul.f32 %v637, 1.442695
      %v651 = vpow.pop %v650
      %v652 = vmul.f32 %v638, 1.442695
      %v653 = vpow.pop %v652
      %v654 = vmul.f32 %v639, 1.442695
      %v655 = vpow.pop %v654
      %v656 = vadd.f32 %v641, %v643
      %v657 = vadd.f32 %v656, %v645
      %v658 = vadd.f32 %v657, %v647
      %v659 = vadd.f32 %v658, %v649
      %v660 = vadd.f32 %v659, %v651
      %v661 = vadd.f32 %v660, %v653
      %v662 = vadd.f32 %v661, %v655
      %v663 = vrcp.pop %v662
      %v664 = vmul.f32 %v641, %v663
      %v665 = vmul.f32 %v643, %v663
      %v666 = vmul.f32 %v645, %v663
      %v667 = vmul.f32 %v647, %v663
      %v668 = vmul.f32 %v649, %v663
      %v669 = vmul.f32 %v651, %v663
      %v670 = vmul.f32 %v653, %v663
      %v671 = vmul.f32 %v655, %v663
      %v672 = vunpack.c.l.bf16 %v223
      %v673 = vunpack.c.l.bf16 %v224
      %v674 = vunpack.c.l.bf16 %v225
      %v675 = vunpack.c.l.bf16 %v226
      %v676 = vunpack.c.l.bf16 %v227
      %v677 = vunpack.c.l.bf16 %v228
      %v678 = vunpack.c.l.bf16 %v229
      %v679 = vunpack.c.l.bf16 %v230
      %v680 = vmul.f32 %v664, %v672
      %v681 = vmul.f32 %v665, %v673
      %v682 = vmul.f32 %v666, %v674
      %v683 = vmul.f32 %v667, %v675
      %v684 = vmul.f32 %v668, %v676
      %v685 = vmul.f32 %v669, %v677
      %v686 = vmul.f32 %v670, %v678
      %v687 = vmul.f32 %v671, %v679
      %v688 = vsel %vm539, %v680, 0.0
      %v689 = vsel %vm539, %v681, 0.0
      %v690 = vadd.f32 %v688, %v689
      %v691 = vsel %vm539, %v682, 0.0
      %v692 = vadd.f32 %v690, %v691
      %v693 = vsel %vm539, %v683, 0.0
      %v694 = vadd.f32 %v692, %v693
      %v695 = vsel %vm539, %v684, 0.0
      %v696 = vadd.f32 %v694, %v695
      %v697 = vsel %vm539, %v685, 0.0
      %v698 = vadd.f32 %v696, %v697
      %v699 = vsel %vm539, %v686, 0.0
      %v700 = vadd.f32 %v698, %v699
      %v701 = vsel %vm539, %v687, 0.0
      %v702 = vadd.f32 %v700, %v701
      %v703 = vpack.c.bf16 %v221, %v221
      %v704 = vpack.c.bf16 %v702, %v702
      %v705 = vld [vmem:[#allocation15] sm:$0xff]
      %v706 = vld [vmem:[#allocation15 + $0x8] sm:$0xf]
      %v707 = vld [vmem:[#allocation15 + $0xc] sm:$0xff]
      %v708 = vld [vmem:[#allocation15 + $0x14] sm:$0xf]
      %v709 = vld [vmem:[#allocation15 + $0x18] sm:$0xff]
      %v710 = vld [vmem:[#allocation15 + $0x20] sm:$0xf]
      %v711 = vld [vmem:[#allocation15 + $0x24] sm:$0xff]
      %v712 = vld [vmem:[#allocation15 + $0x2c] sm:$0xf]
      %v713 = vld [vmem:[#allocation16] sm:$0xff]
      %v714 = vld [vmem:[#allocation16 + $0x8] sm:$0xf]
      %v715 = vld [vmem:[#allocation16 + $0xc] sm:$0xff]
      %v716 = vld [vmem:[#allocation16 + $0x14] sm:$0xf]
      %v717 = vld [vmem:[#allocation16 + $0x18] sm:$0xff]
      %v718 = vld [vmem:[#allocation16 + $0x20] sm:$0xf]
      %v719 = vld [vmem:[#allocation16 + $0x24] sm:$0xff]
      %v720 = vld [vmem:[#allocation16 + $0x2c] sm:$0xf]
      %v721 = vld [vmem:[#allocation16 + $0x30] sm:$0xff]
      %v722 = vld [vmem:[#allocation16 + $0x38] sm:$0xf]
      %v723 = vld [vmem:[#allocation16 + $0x3c] sm:$0xff]
      %v724 = vld [vmem:[#allocation16 + $0x44] sm:$0xf]
      %v725 = vld [vmem:[#allocation16 + $0x48] sm:$0xff]
      %v726 = vld [vmem:[#allocation16 + $0x50] sm:$0xf]
      %v727 = vld [vmem:[#allocation16 + $0x54] sm:$0xff]
      %v728 = vld [vmem:[#allocation16 + $0x5c] sm:$0xf]
      %v745 = vunpack.c.l.b16 %v713
      %v746 = vunpack.c.h.b16 %v713
      %v747 = vunpack.c.l.b16 %v714
      %v748 = vunpack.c.l.b16 %v715
      %v749 = vunpack.c.h.b16 %v715
      %v750 = vunpack.c.l.b16 %v716
      %v751 = vunpack.c.l.b16 %v717
      %v752 = vunpack.c.h.b16 %v717
      %v753 = vunpack.c.l.b16 %v718
      %v754 = vunpack.c.l.b16 %v719
      %v755 = vunpack.c.h.b16 %v719
      %v756 = vunpack.c.l.b16 %v720
      %v757 = vunpack.c.l.b16 %v721
      %v758 = vunpack.c.h.b16 %v721
      %v759 = vunpack.c.l.b16 %v722
      %v760 = vunpack.c.l.b16 %v723
      %v761 = vunpack.c.h.b16 %v723
      %v762 = vunpack.c.l.b16 %v724
      %v763 = vunpack.c.l.b16 %v725
      %v764 = vunpack.c.h.b16 %v725
      %v765 = vunpack.c.l.b16 %v726
      %v766 = vunpack.c.l.b16 %v727
      %v767 = vunpack.c.h.b16 %v727
      %v768 = vunpack.c.l.b16 %v728
      %v769 = vpack.c.b16 %v748, %v745
      %v770 = vpack.c.b16 %v749, %v746
      %v771 = vpack.c.b16 %v750, %v747
      %v772 = vpack.c.b16 %v754, %v751
      %v773 = vpack.c.b16 %v755, %v752
      %v774 = vpack.c.b16 %v756, %v753
      %v775 = vpack.c.b16 %v760, %v757
      %v776 = vpack.c.b16 %v761, %v758
      %v777 = vpack.c.b16 %v762, %v759
      %v778 = vpack.c.b16 %v766, %v763
      %v779 = vpack.c.b16 %v767, %v764
      %v780 = vpack.c.b16 %v768, %v765
      %v794 = vsel %vm539, %v704, 0
      %796 = vmatpush.bf16.msra.mxu0 0
      %797 = vmatpush.bf16.msra.mxu0 0
      %798 = vmatpush.bf16.msra.mxu0 0
      %799 = vmatpush.bf16.msra.mxu0 0
      %800 = vmatpush.bf16.msra.mxu0 %v778
      %801 = vmatpush.bf16.msra.mxu0 %v775
      %802 = vmatpush.bf16.msra.mxu0 %v772
      %803 = vmatpush.bf16.msra.mxu0 %v769
      %804 = vmatmul.bf16.gmra.mxu0 %v794
      %v805 = vpop.f32.mrf.mxu0
      %v806 = vadd.f32 0.0, %v805
      %v807 = vpop.f32.mrf.mxu0
      %808 = vdwg.mxu0
      %809 = vmatpush.bf16.msra.mxu0 0
      %810 = vmatpush.bf16.msra.mxu0 0
      %811 = vmatpush.bf16.msra.mxu0 0
      %812 = vmatpush.bf16.msra.mxu0 0
      %813 = vmatpush.bf16.msra.mxu0 %v779
      %814 = vmatpush.bf16.msra.mxu0 %v776
      %815 = vmatpush.bf16.msra.mxu0 %v773
      %816 = vmatpush.bf16.msra.mxu0 %v770
      %817 = vmatmul.bf16.gmra.mxu0 %v794
      %v818 = vpop.f32.mrf.mxu0
      %v819 = vadd.f32 0.0, %v818
      %v820 = vpop.f32.mrf.mxu0
      %821 = vdwg.mxu0
      %822 = vmatpush.bf16.msra.mxu0 0
      %823 = vmatpush.bf16.msra.mxu0 0
      %824 = vmatpush.bf16.msra.mxu0 0
      %825 = vmatpush.bf16.msra.mxu0 0
      %826 = vmatpush.bf16.msra.mxu0 %v780
      %827 = vmatpush.bf16.msra.mxu0 %v777
      %828 = vmatpush.bf16.msra.mxu0 %v774
      %829 = vmatpush.bf16.msra.mxu0 %v771
      %830 = vmatmul.bf16.gmra.mxu0 %v794
      %v831 = vpop.f32.mrf.mxu0
      %v832 = vadd.f32 0.0, %v831
      %v833 = vpop.f32.mrf.mxu0
      %834 = vdwg.mxu0
      %v843 = vunpack.c.l.b16 %v705
      %v844 = vunpack.c.h.b16 %v705
      %v845 = vunpack.c.l.b16 %v706
      %v846 = vunpack.c.l.b16 %v707
      %v847 = vunpack.c.h.b16 %v707
      %v848 = vunpack.c.l.b16 %v708
      %v849 = vunpack.c.l.b16 %v709
      %v850 = vunpack.c.h.b16 %v709
      %v851 = vunpack.c.l.b16 %v710
      %v852 = vunpack.c.l.b16 %v711
      %v853 = vunpack.c.h.b16 %v711
      %v854 = vunpack.c.l.b16 %v712
      %v855 = vpack.c.b16 %v846, %v843
      %v856 = vpack.c.b16 %v847, %v844
      %v857 = vpack.c.b16 %v848, %v845
      %v858 = vpack.c.b16 %v852, %v849
      %v859 = vpack.c.b16 %v853, %v850
      %v860 = vpack.c.b16 %v854, %v851
      %vm867 = vcmask 261120
      %v869 = vsel %vm867, %v703, 0
      %871 = vmatpush.bf16.msra.mxu0 0
      %872 = vmatpush.bf16.msra.mxu0 0
      %873 = vmatpush.bf16.msra.mxu0 0
      %874 = vmatpush.bf16.msra.mxu0 0
      %875 = vmatpush.bf16.msra.mxu0 0
      %876 = vmatpush.bf16.msra.mxu0 0
      %877 = vmatpush.bf16.msra.mxu0 %v858
      %878 = vmatpush.bf16.msra.mxu0 %v855
      %879 = vmatmul.bf16.gmra.mxu0 %v869
      %v880 = vpop.f32.mrf.mxu0
      %v881 = vadd.f32 %v806, %v880
      %v882 = vpop.f32.mrf.mxu0
      %883 = vdwg.mxu0
      %884 = vmatpush.bf16.msra.mxu0 0
      %885 = vmatpush.bf16.msra.mxu0 0
      %886 = vmatpush.bf16.msra.mxu0 0
      %887 = vmatpush.bf16.msra.mxu0 0
      %888 = vmatpush.bf16.msra.mxu0 0
      %889 = vmatpush.bf16.msra.mxu0 0
      %890 = vmatpush.bf16.msra.mxu0 %v859
      %891 = vmatpush.bf16.msra.mxu0 %v856
      %892 = vmatmul.bf16.gmra.mxu0 %v869
      %v893 = vpop.f32.mrf.mxu0
      %v894 = vadd.f32 %v819, %v893
      %v895 = vpop.f32.mrf.mxu0
      %896 = vdwg.mxu0
      %897 = vmatpush.bf16.msra.mxu0 0
      %898 = vmatpush.bf16.msra.mxu0 0
      %899 = vmatpush.bf16.msra.mxu0 0
      %900 = vmatpush.bf16.msra.mxu0 0
      %901 = vmatpush.bf16.msra.mxu0 0
      %902 = vmatpush.bf16.msra.mxu0 0
      %903 = vmatpush.bf16.msra.mxu0 %v860
      %904 = vmatpush.bf16.msra.mxu0 %v857
      %905 = vmatmul.bf16.gmra.mxu0 %v869
      %v906 = vpop.f32.mrf.mxu0
      %v907 = vadd.f32 %v832, %v906
      %v908 = vpop.f32.mrf.mxu0
      %909 = vdwg.mxu0
      %v910 = vld [vmem:[%s8] sm:$0x7]
      %v912 = vperm.slane %v910, 0
      %v913 = vperm.slane %v910, 1
      %v914 = vperm.slane %v910, 2
      %v918 = vadd.f32 %v881, %v912
      %v919 = vadd.f32 %v894, %v913
      %v920 = vadd.f32 %v907, %v914
      %v921 = vadd.f32 %v918, %v484
      %v922 = vxor.u32 %v921, 2147483648
      %v923 = vmul.f32 %v922, 1.442695
      %v924 = vpow.pop %v923
      %v925 = vadd.f32 %v924, 1.0
      %v926 = vrcp.pop %v925
      %v927 = vmul.f32 %v925, %v926
      %v928 = vsub.f32 1.0, %v927
      %v929 = vmul.f32 %v926, %v928
      %v930 = vadd.f32 %v926, %v929
      %vm931 = vweird.f32 %v925
      %vm932 = vweird.f32 %v926
      %vm933 = vmor %vm931, %vm932
      %v934 = vsel %vm933, %v926, %v930
      %v935 = vand.u32 2147483647, %v925
      %vm936 = vcmp.eq.f32.partialorder %v935, 8.507059e+37
      %v937 = vand.u32 %v925, 2147483648
      %v938 = vor.u32 1.1754944e-38, %v937
      %v939 = vsel %vm936, %v938, %v934
      %v940 = vmul.f32 1.0, %v939
      %v941 = vadd.f32 %v919, %v485
      %v942 = vxor.u32 %v941, 2147483648
      %v943 = vmul.f32 %v942, 1.442695
      %v944 = vpow.pop %v943
      %v945 = vadd.f32 %v944, 1.0
      %v946 = vrcp.pop %v945
      %v947 = vmul.f32 %v945, %v946
      %v948 = vsub.f32 1.0, %v947
      %v949 = vmul.f32 %v946, %v948
      %v950 = vadd.f32 %v946, %v949
      %vm951 = vweird.f32 %v945
      %vm952 = vweird.f32 %v946
      %vm953 = vmor %vm951, %vm952
      %v954 = vsel %vm953, %v946, %v950
      %v955 = vand.u32 2147483647, %v945
      %vm956 = vcmp.eq.f32.partialorder %v955, 8.507059e+37
      %v957 = vand.u32 %v945, 2147483648
      %v958 = vor.u32 1.1754944e-38, %v957
      %v959 = vsel %vm956, %v958, %v954
      %v960 = vmul.f32 1.0, %v959
      %v961 = vmul.f32 %v940, %v486
      %v962 = vadd.f32 %v920, %v961
      %v963 = vtanh.pop %v962
      %v964 = vsub.f32 1.0, %v960
      %v965 = vmul.f32 %v964, %v963
      %v966 = vmul.f32 %v960, %v222
      %v967 = vadd.f32 %v965, %v966
      %968 = vst [vmem:[#allocation23] sm:$0xff] %v967
      %v969 = vpack.c.bf16 %v967, %v967
      %970 = vst [vmem:[#allocation2] sm:$0xf] %v969
      %vm971 = vcmask 519168
      %972 = vst.msk [vmem:[#allocation3] sm:$0xf] %vm971, %v704
    $region105: #{tpu_custom_call.1} parent=1 // pred_fallthru
      _
    %v973 = vld [vmem:[#allocation2] sm:$0xf]
    %v974 = vld [vmem:[#allocation18] sm:$0xf]
    %v975 = vld [vmem:[#allocation18 + $0x4] sm:$0xf]
    %v976 = vld [vmem:[#allocation18 + $0x8] sm:$0xf]
    %v977 = vld [vmem:[#allocation18 + $0xc] sm:$0xf]
    %v978 = vld [vmem:[#allocation18 + $0x10] sm:$0xf]
    %v979 = vld [vmem:[#allocation18 + $0x14] sm:$0xf]
    %v980 = vld [vmem:[#allocation18 + $0x18] sm:$0xf]
    %v981 = vld [vmem:[#allocation18 + $0x1c] sm:$0xf]
    %v982 = vld [vmem:[#allocation18 + $0x20] sm:$0xf]
    %v983 = vld [vmem:[#allocation18 + $0x24] sm:$0xf]
    %v984 = vld [vmem:[#allocation18 + $0x28] sm:$0xf]
    %v985 = vld [vmem:[#allocation18 + $0x2c] sm:$0xf]
    %v986 = vld [vmem:[#allocation18 + $0x30] sm:$0xf]
    %v987 = vld [vmem:[#allocation18 + $0x34] sm:$0xf]
    %v988 = vld [vmem:[#allocation18 + $0x38] sm:$0xf]
    %v989 = vld [vmem:[#allocation18 + $0x3c] sm:$0xf]
    %v990 = vld [vmem:[#allocation3] sm:$0xf]
    %v991 = vld [vmem:[#allocation19] sm:$0xf]
    %v992 = vld [vmem:[#allocation19 + $0x4] sm:$0xf]
    %v993 = vld [vmem:[#allocation19 + $0x8] sm:$0xf]
    %v994 = vld [vmem:[#allocation19 + $0xc] sm:$0xf]
    %v995 = vld [vmem:[#allocation19 + $0x10] sm:$0xf]
    %v996 = vld [vmem:[#allocation19 + $0x14] sm:$0xf]
    %v997 = vld [vmem:[#allocation19 + $0x18] sm:$0xf]
    %v998 = vld [vmem:[#allocation19 + $0x1c] sm:$0xf]
    %v1007 = vunpack.c.l.b16 %v991
    %v1008 = vunpack.c.l.b16 %v992
    %v1009 = vunpack.c.l.b16 %v993
    %v1010 = vunpack.c.l.b16 %v994
    %v1011 = vunpack.c.l.b16 %v995
    %v1012 = vunpack.c.l.b16 %v996
    %v1013 = vunpack.c.l.b16 %v997
    %v1014 = vunpack.c.l.b16 %v998
    %v1015 = vpack.c.b16 %v1008, %v1007
    %v1016 = vpack.c.b16 %v1010, %v1009
    %v1017 = vpack.c.b16 %v1012, %v1011
    %v1018 = vpack.c.b16 %v1014, %v1013
    %vm1023 = vcmask 523264
    %v1025 = vsel %vm1023, %v990, 0
    %1027 = vmatpush.bf16.msra.mxu0 0
    %1028 = vmatpush.bf16.msra.mxu0 0
    %1029 = vmatpush.bf16.msra.mxu0 0
    %1030 = vmatpush.bf16.msra.mxu0 0
    %1031 = vmatpush.bf16.msra.mxu0 %v1018
    %1032 = vmatpush.bf16.msra.mxu0 %v1017
    %1033 = vmatpush.bf16.msra.mxu0 %v1016
    %1034 = vmatpush.bf16.msra.mxu0 %v1015
    %1035 = vmatmul.bf16.gmra.mxu0 %v1025
    %v1036 = vpop.f32.mrf.mxu0
    %v1037 = vadd.f32 0.0, %v1036
    %v1038 = vpop.f32.mrf.mxu0
    %1039 = vdwg.mxu0
    %v1056 = vunpack.c.l.b16 %v974
    %v1057 = vunpack.c.l.b16 %v975
    %v1058 = vunpack.c.l.b16 %v976
    %v1059 = vunpack.c.l.b16 %v977
    %v1060 = vunpack.c.l.b16 %v978
    %v1061 = vunpack.c.l.b16 %v979
    %v1062 = vunpack.c.l.b16 %v980
    %v1063 = vunpack.c.l.b16 %v981
    %v1064 = vunpack.c.l.b16 %v982
    %v1065 = vunpack.c.l.b16 %v983
    %v1066 = vunpack.c.l.b16 %v984
    %v1067 = vunpack.c.l.b16 %v985
    %v1068 = vunpack.c.l.b16 %v986
    %v1069 = vunpack.c.l.b16 %v987
    %v1070 = vunpack.c.l.b16 %v988
    %v1071 = vunpack.c.l.b16 %v989
    %v1072 = vpack.c.b16 %v1057, %v1056
    %v1073 = vpack.c.b16 %v1059, %v1058
    %v1074 = vpack.c.b16 %v1061, %v1060
    %v1075 = vpack.c.b16 %v1063, %v1062
    %v1076 = vpack.c.b16 %v1065, %v1064
    %v1077 = vpack.c.b16 %v1067, %v1066
    %v1078 = vpack.c.b16 %v1069, %v1068
    %v1079 = vpack.c.b16 %v1071, %v1070
    %1088 = vmatpush.bf16.msra.mxu0 %v1079
    %1089 = vmatpush.bf16.msra.mxu0 %v1078
    %1090 = vmatpush.bf16.msra.mxu0 %v1077
    %1091 = vmatpush.bf16.msra.mxu0 %v1076
    %1092 = vmatpush.bf16.msra.mxu0 %v1075
    %1093 = vmatpush.bf16.msra.mxu0 %v1074
    %1094 = vmatpush.bf16.msra.mxu0 %v1073
    %1095 = vmatpush.bf16.msra.mxu0 %v1072
    %1096 = vmatmul.bf16.gmra.mxu0 %v973
    %v1097 = vpop.f32.mrf.mxu0
    %v1098 = vadd.f32 %v1037, %v1097
    %v1099 = vpop.f32.mrf.mxu0
    %1100 = vdwg.mxu0
    %v1101 = vld [vmem:[#allocation4] sm:$0xff]
    %v1102 = vpack.c.bf16 %v1101, %v1101
    %v1103 = vld [vmem:[#allocation21] sm:$0xf]
    %v1104 = vld [vmem:[#allocation21 + $0x4] sm:$0xf]
    %v1105 = vld [vmem:[#allocation21 + $0x8] sm:$0xf]
    %v1106 = vld [vmem:[#allocation21 + $0xc] sm:$0xf]
    %v1111 = vunpack.c.l.b16 %v1103
    %v1112 = vunpack.c.l.b16 %v1104
    %v1113 = vunpack.c.l.b16 %v1105
    %v1114 = vunpack.c.l.b16 %v1106
    %v1115 = vpack.c.b16 %v1112, %v1111
    %v1116 = vpack.c.b16 %v1114, %v1113
    %vm1119 = vcmask 261120
    %v1121 = vsel %vm1119, %v1102, 0
    %1123 = vmatpush.bf16.msra.mxu0 0
    %1124 = vmatpush.bf16.msra.mxu0 0
    %1125 = vmatpush.bf16.msra.mxu0 0
    %1126 = vmatpush.bf16.msra.mxu0 0
    %1127 = vmatpush.bf16.msra.mxu0 0
    %1128 = vmatpush.bf16.msra.mxu0 0
    %1129 = vmatpush.bf16.msra.mxu0 %v1116
    %1130 = vmatpush.bf16.msra.mxu0 %v1115
    %1131 = vmatmul.bf16.gmra.mxu0 %v1121
    %v1132 = vpop.f32.mrf.mxu0
    %v1133 = vadd.f32 0.0, %v1132
    %v1134 = vpop.f32.mrf.mxu0
    %1135 = vdwg.mxu0
    %v1136 = vadd.f32 %v1098, %v1133
    %v1137 = vld [vmem:[%s13] sm:$0x1]
    %v1139 = vperm.slane %v1137, 0
    %v1141 = vadd.f32 %v1136, %v1139
    %1142 = vst [vmem:[#allocation22] sm:$0xff] %v1141
    // Predicated region
    $region106: #{tpu_custom_call.1} parent=1 // pred_check
      _
    $region107: #{tpu_custom_call.1} parent=1 // pred_check_branch
      %1144 = sbr.rel (0) target = $region109
    $region108: #{tpu_custom_call.1} parent=1 // pred_region
      %1146 = vsyncadd [#allocation6], 0
      %s1148 = sshll.u32 [#allocation22], 4
      %s1149 = int_to_ptr.vmem [resolvable:$true] %s1148
      %s1150 = sshll.u32 %s14, 4
      %s1151 = int_to_ptr.hbm [resolvable:$true] %s1150
      %1153 = dma.vmem_to_hbm [thread:$0]  %s1149, 128, %s1151, [#allocation6]
    $region109: #{tpu_custom_call.1} parent=1 // pred_fallthru
      _
    // Predicated region
    $region110: #{tpu_custom_call.1} parent=1 // pred_check
      _
    $region111: #{tpu_custom_call.1} parent=1 // pred_check_branch
      %1155 = sbr.rel (0) target = $region113
    $region112: #{tpu_custom_call.1} parent=1 // pred_region
      %1157 = vsyncadd [#allocation24], 0
      %s1159 = sshll.u32 [#allocation23], 4
      %s1160 = int_to_ptr.vmem [resolvable:$true] %s1159
      %s1161 = sshll.u32 %s15, 4
      %s1162 = int_to_ptr.hbm [resolvable:$true] %s1161
      %1164 = dma.vmem_to_hbm [thread:$0]  %s1160, 128, %s1162, [#allocation24]
    $region113: #{tpu_custom_call.1} parent=1 // pred_fallthru
      _
    // Predicated region
    $region114: #{tpu_custom_call.1} parent=1 // pred_check
      _
    $region115: #{tpu_custom_call.1} parent=1 // pred_check_branch
      %1166 = sbr.rel (0) target = $region117
    $region116: #{tpu_custom_call.1} parent=1 // pred_region
      %1168 = dma.done [#allocation6], 128
    $region117: #{tpu_custom_call.1} parent=1 // pred_fallthru
      _
    // Predicated region
    $region118: #{tpu_custom_call.1} parent=1 // pred_check
      _
    $region119: #{tpu_custom_call.1} parent=1 // pred_check_branch
      %1170 = sbr.rel (0) target = $region121
    $region120: #{tpu_custom_call.1} parent=1 // pred_region
      %1172 = dma.done [#allocation24], 128
    $region121: #{tpu_custom_call.1} parent=1 // pred_fallthru
      _
    %1173 = vsyncpa [#allocation5], 1
    %1174 = vsyncpa [#allocation8], 1
    %1175 = vsyncpa [#allocation11], 1
    %1176 = vsyncpa [#allocation14], 1
    %1177 = vsyncpa [#allocation17], 1
    %1178 = vsyncpa [#allocation20], 1
    %1179 = vsyncpa [#allocation6], 1
    %1180 = vsyncpa [#allocation24], 1

// kernel: tpu_custom_call.1
$region0: #{tpu_custom_call.1}
  #allocation0 [shape = 'u32[]', space=smem, size = 0x4, offset = 0x4, fixed_abs, tag = 'smem constant byte address 0x4 - core index']
  #allocation1 [shape = 'u32[72,128]{1,0:T(1,128)}', space=vmem, size = 0x9000, scoped, tag = 'internal scratch']
  #allocation2 [shape = 'bf16[8,128]{1,0:T(8,128)(2,1)}', space=vmem, size = 0x800, scoped, tag = 'scratch operand']
  #allocation3 [shape = 'bf16[8,64]{1,0:T(8,128)(2,1)}', space=vmem, size = 0x800, scoped, tag = 'scratch operand']
  %s0 = inlined_call_operand.hbm [shape: f32[8,32], index: 0, kind: input, shape index: {}]
  %s1 = inlined_call_operand.hbm [shape: f32[8,128], index: 1, kind: input, shape index: {}]
  %s2 = inlined_call_operand.hbm [shape: bf16[8,8,64], index: 2, kind: input, shape index: {}]
  %s3 = inlined_call_operand.hbm [shape: bf16[128,512], index: 3, kind: input, shape index: {}]
  %s4 = inlined_call_operand.hbm [shape: bf16[64,128], index: 4, kind: input, shape index: {}]
  %s5 = inlined_call_operand.hbm [shape: f32[1,128], index: 5, kind: input, shape index: {}]
  %s6 = inlined_call_operand.hbm [shape: bf16[32,384], index: 6, kind: input, shape index: {}]
  %s7 = inlined_call_operand.hbm [shape: bf16[64,384], index: 7, kind: input, shape index: {}]
  %s8 = inlined_call_operand.vmem [shape: f32[1,384], index: 8, kind: input, shape index: {}]
  %s9 = inlined_call_operand.vmem [shape: f32[1,384], index: 9, kind: input, shape index: {}]
  %s10 = inlined_call_operand.hbm [shape: bf16[128,128], index: 10, kind: input, shape index: {}]
  %s11 = inlined_call_operand.hbm [shape: bf16[64,128], index: 11, kind: input, shape index: {}]
  %s12 = inlined_call_operand.hbm [shape: bf16[32,128], index: 12, kind: input, shape index: {}]
  %s13 = inlined_call_operand.vmem [shape: f32[1,128], index: 13, kind: input, shape index: {}]
  %s14 = inlined_call_operand.hbm [shape: f32[8,128], index: 14, kind: output, shape index: {0}]
  %s15 = inlined_call_operand.hbm [shape: f32[8,128], index: 15, kind: output, shape index: {1}]
  %16 = xla_tuple %s14, %s15
  %s17 = sld [smem:[#allocation0]]
  $region122: #{tpu_custom_call.1} parent=0
    _
  %s19 = ssub.s32 1, %s17
  %s20 = scalar_select 0, %s19, %s17
  $region1: #{tpu_custom_call.1} parent=0
    #allocation4 [shape = 'u8[4096]{0}', space=vmem, size = 0x1000, scoped, tag = 'input window, operand 0, single buffered']
    #allocation5 [shape = 's32[1]{0}', space=sflag, size = 0x4, scoped, tag = 'scoped memory for tpu_custom_call.1']
    #allocation6 [shape = 's32[1]{0}', space=sflag, size = 0x4, scoped, tag = 'scoped memory for tpu_custom_call.1']
    #allocation7 [shape = 'u8[4096]{0}', space=vmem, size = 0x1000, scoped, tag = 'input window, operand 1, single buffered']
    #allocation8 [shape = 's32[1]{0}', space=sflag, size = 0x4, scoped, tag = 'scoped memory for tpu_custom_call.1']
    #allocation9 [shape = 'u8[16384]{0}', space=vmem, size = 0x4000, scoped, tag = 'input window, operand 2, single buffered']
    #allocation10 [shape = 'u8[131072]{0}', space=vmem, size = 0x20000, scoped, tag = 'input window, operand 3, single buffered']
    #allocation11 [shape = 's32[1]{0}', space=sflag, size = 0x4, scoped, tag = 'scoped memory for tpu_custom_call.1']
    #allocation12 [shape = 'u8[16384]{0}', space=vmem, size = 0x4000, scoped, tag = 'input window, operand 4, single buffered']
    #allocation13 [shape = 'u8[512]{0}', space=vmem, size = 0x400, scoped, tag = 'input window, operand 5, single buffered']
    #allocation14 [shape = 's32[1]{0}', space=sflag, size = 0x4, scoped, tag = 'scoped memory for tpu_custom_call.1']
    #allocation15 [shape = 'u8[24576]{0}', space=vmem, size = 0x6000, scoped, tag = 'input window, operand 6, single buffered']
    #allocation16 [shape = 'u8[49152]{0}', space=vmem, size = 0xc000, scoped, tag = 'input window, operand 7, single buffered']
    #allocation17 [shape = 's32[1]{0}', space=sflag, size = 0x4, scoped, tag = 'scoped memory for tpu_custom_call.1']
    #allocation18 [shape = 'u8[32768]{0}', space=vmem, size = 0x8000, scoped, tag = 'input window, operand 10, single buffered']
    #allocation19 [shape = 'u8[16384]{0}', space=vmem, size = 0x4000, scoped, tag = 'input window, operand 11, single buffered']
    #allocation20 [shape = 's32[1]{0}', space=sflag, size = 0x4, scoped, tag = 'scoped memory for tpu_custom_call.1']
    #allocation21 [shape = 'u8[8192]{0}', space=vmem, size = 0x2000, scoped, tag = 'input window, operand 12, single buffered']
    #allocation22 [shape = 'u8[4096]{0}', space=vmem, size = 0x1000, scoped, tag = 'output window, operand 0, single buffered']
    #allocation23 [shape = 'u8[4096]{0}', space=vmem, size = 0x1000, scoped, tag = 'output window, operand 1, single buffered']
    #allocation24 [shape = 's32[1]{0}', space=sflag, size = 0x4, scoped, tag = 'scoped memory for tpu_custom_call.1']
    %21 = vsyncpa [#allocation5], 0
    %22 = vsyncpa [#allocation8], 0
    %23 = vsyncpa [#allocation11], 0
    %24 = vsyncpa [#allocation14], 0
    %25 = vsyncpa [#allocation17], 0
    %26 = vsyncpa [#allocation20], 0
    %27 = vsyncpa [#allocation6], 0
    %28 = vsyncpa [#allocation24], 0
    // Predicated region
    $region2: #{tpu_custom_call.1} parent=1 // pred_check
      _
    $region3: #{tpu_custom_call.1} parent=1 // pred_check_branch
      %30 = sbr.rel (0) target = $region5
    $region4: #{tpu_custom_call.1} parent=1 // pred_region
      %32 = vsyncadd [#allocation5], 0
      %s34 = sshll.u32 %s0, 4
      %s35 = int_to_ptr.hbm [resolvable:$true] %s34
      %s36 = sshll.u32 [#allocation4], 4
      %s37 = int_to_ptr.vmem [resolvable:$true] %s36
      %39 = dma.hbm_to_vmem [thread:$0]  %s35, 128, %s37, [#allocation5]
    $region5: #{tpu_custom_call.1} parent=1 // pred_fallthru
      _
    // Predicated region
    $region6: #{tpu_custom_call.1} parent=1 // pred_check
      _
    $region7: #{tpu_custom_call.1} parent=1 // pred_check_branch
      %41 = sbr.rel (0) target = $region9
    $region8: #{tpu_custom_call.1} parent=1 // pred_region
      %43 = vsyncadd [#allocation8], 0
      %s45 = sshll.u32 %s1, 4
      %s46 = int_to_ptr.hbm [resolvable:$true] %s45
      %s47 = sshll.u32 [#allocation7], 4
      %s48 = int_to_ptr.vmem [resolvable:$true] %s47
      %50 = dma.hbm_to_vmem [thread:$0]  %s46, 128, %s48, [#allocation8]
    $region9: #{tpu_custom_call.1} parent=1 // pred_fallthru
      _
    // Predicated region
    $region10: #{tpu_custom_call.1} parent=1 // pred_check
      _
    $region11: #{tpu_custom_call.1} parent=1 // pred_check_branch
      %52 = sbr.rel (0) target = $region13
    $region12: #{tpu_custom_call.1} parent=1 // pred_region
      %54 = vsyncadd [#allocation8], 0
      %s55 = sshll.u32 %s2, 4
      %s56 = int_to_ptr.hbm [resolvable:$true] %s55
      %s57 = sshll.u32 [#allocation9], 4
      %s58 = int_to_ptr.vmem [resolvable:$true] %s57
      %63 = dma.hbm_to_vmem [thread:$0]  %s56, 512, %s58, [#allocation8], 64, 64, 4
    $region13: #{tpu_custom_call.1} parent=1 // pred_fallthru
      _
    // Predicated region
    $region14: #{tpu_custom_call.1} parent=1 // pred_check
      _
    $region15: #{tpu_custom_call.1} parent=1 // pred_check_branch
      %65 = sbr.rel (0) target = $region17
    $region16: #{tpu_custom_call.1} parent=1 // pred_region
      %67 = vsyncadd [#allocation11], 0
      %s68 = sshll.u32 %s3, 4
      %s69 = int_to_ptr.hbm [resolvable:$true] %s68
      %s70 = sshll.u32 [#allocation10], 4
      %s71 = int_to_ptr.vmem [resolvable:$true] %s70
      %76 = dma.hbm_to_vmem [thread:$0]  %s69, 4096, %s71, [#allocation11], 256, 256, 16
    $region17: #{tpu_custom_call.1} parent=1 // pred_fallthru
      _
    // Predicated region
    $region18: #{tpu_custom_call.1} parent=1 // pred_check
      _
    $region19: #{tpu_custom_call.1} parent=1 // pred_check_branch
      %78 = sbr.rel (0) target = $region21
    $region20: #{tpu_custom_call.1} parent=1 // pred_region
      %80 = vsyncadd [#allocation11], 0
      %s81 = sshll.u32 %s4, 4
      %s82 = int_to_ptr.hbm [resolvable:$true] %s81
      %s83 = sshll.u32 [#allocation12], 4
      %s84 = int_to_ptr.vmem [resolvable:$true] %s83
      %89 = dma.hbm_to_vmem [thread:$0]  %s82, 512, %s84, [#allocation11], 64, 64, 4
    $region21: #{tpu_custom_call.1} parent=1 // pred_fallthru
      _
    // Predicated region
    $region22: #{tpu_custom_call.1} parent=1 // pred_check
      _
    $region23: #{tpu_custom_call.1} parent=1 // pred_check_branch
      %91 = sbr.rel (0) target = $region25
    $region24: #{tpu_custom_call.1} parent=1 // pred_region
      %93 = vsyncadd [#allocation14], 0
      %s95 = sshll.u32 %s5, 4
      %s96 = int_to_ptr.hbm [resolvable:$true] %s95
      %s97 = sshll.u32 [#allocation13], 4
      %s98 = int_to_ptr.vmem [resolvable:$true] %s97
      %100 = dma.hbm_to_vmem [thread:$0]  %s96, 16, %s98, [#allocation14]
    $region25: #{tpu_custom_call.1} parent=1 // pred_fallthru
      _
    // Predicated region
    $region26: #{tpu_custom_call.1} parent=1 // pred_check
      _
    $region27: #{tpu_custom_call.1} parent=1 // pred_check_branch
      %102 = sbr.rel (0) target = $region29
    $region28: #{tpu_custom_call.1} parent=1 // pred_region
      %104 = vsyncadd [#allocation14], 0
      %s105 = sshll.u32 %s6, 4
      %s106 = int_to_ptr.hbm [resolvable:$true] %s105
      %s107 = sshll.u32 [#allocation15], 4
      %s108 = int_to_ptr.vmem [resolvable:$true] %s107
      %113 = dma.hbm_to_vmem [thread:$0]  %s106, 768, %s108, [#allocation14], 192, 192, 12
    $region29: #{tpu_custom_call.1} parent=1 // pred_fallthru
      _
    // Predicated region
    $region30: #{tpu_custom_call.1} parent=1 // pred_check
      _
    $region31: #{tpu_custom_call.1} parent=1 // pred_check_branch
      %115 = sbr.rel (0) target = $region33
    $region32: #{tpu_custom_call.1} parent=1 // pred_region
      %117 = vsyncadd [#allocation17], 0
      %s118 = sshll.u32 %s7, 4
      %s119 = int_to_ptr.hbm [resolvable:$true] %s118
      %s120 = sshll.u32 [#allocation16], 4
      %s121 = int_to_ptr.vmem [resolvable:$true] %s120
      %126 = dma.hbm_to_vmem [thread:$0]  %s119, 1536, %s121, [#allocation17], 192, 192, 12
    $region33: #{tpu_custom_call.1} parent=1 // pred_fallthru
      _
    // Predicated region
    $region34: #{tpu_custom_call.1} parent=1 // pred_check
      _
    $region35: #{tpu_custom_call.1} parent=1 // pred_check_branch
      %128 = sbr.rel (0) target = $region37
    $region36: #{tpu_custom_call.1} parent=1 // pred_region
      _
    $region37: #{tpu_custom_call.1} parent=1 // pred_fallthru
      _
    // Predicated region
    $region38: #{tpu_custom_call.1} parent=1 // pred_check
      _
    $region39: #{tpu_custom_call.1} parent=1 // pred_check_branch
      %130 = sbr.rel (0) target = $region41
    $region40: #{tpu_custom_call.1} parent=1 // pred_region
      _
    $region41: #{tpu_custom_call.1} parent=1 // pred_fallthru
      _
    // Predicated region
    $region42: #{tpu_custom_call.1} parent=1 // pred_check
      _
    $region43: #{tpu_custom_call.1} parent=1 // pred_check_branch
      %132 = sbr.rel (0) target = $region45
    $region44: #{tpu_custom_call.1} parent=1 // pred_region
      %134 = vsyncadd [#allocation17], 0
      %s135 = sshll.u32 %s10, 4
      %s136 = int_to_ptr.hbm [resolvable:$true] %s135
      %s137 = sshll.u32 [#allocation18], 4
      %s138 = int_to_ptr.vmem [resolvable:$true] %s137
      %143 = dma.hbm_to_vmem [thread:$0]  %s136, 1024, %s138, [#allocation17], 64, 64, 4
    $region45: #{tpu_custom_call.1} parent=1 // pred_fallthru
      _
    // Predicated region
    $region46: #{tpu_custom_call.1} parent=1 // pred_check
      _
    $region47: #{tpu_custom_call.1} parent=1 // pred_check_branch
      %145 = sbr.rel (0) target = $region49
    $region48: #{tpu_custom_call.1} parent=1 // pred_region
      %147 = vsyncadd [#allocation20], 0
      %s148 = sshll.u32 %s11, 4
      %s149 = int_to_ptr.hbm [resolvable:$true] %s148
      %s150 = sshll.u32 [#allocation19], 4
      %s151 = int_to_ptr.vmem [resolvable:$true] %s150
      %156 = dma.hbm_to_vmem [thread:$0]  %s149, 512, %s151, [#allocation20], 64, 64, 4
    $region49: #{tpu_custom_call.1} parent=1 // pred_fallthru
      _
    // Predicated region
    $region50: #{tpu_custom_call.1} parent=1 // pred_check
      _
    $region51: #{tpu_custom_call.1} parent=1 // pred_check_branch
      %158 = sbr.rel (0) target = $region53
    $region52: #{tpu_custom_call.1} parent=1 // pred_region
      %160 = vsyncadd [#allocation20], 0
      %s161 = sshll.u32 %s12, 4
      %s162 = int_to_ptr.hbm [resolvable:$true] %s161
      %s163 = sshll.u32 [#allocation21], 4
      %s164 = int_to_ptr.vmem [resolvable:$true] %s163
      %169 = dma.hbm_to_vmem [thread:$0]  %s162, 256, %s164, [#allocation20], 64, 64, 4
    $region53: #{tpu_custom_call.1} parent=1 // pred_fallthru
      _
    // Predicated region
    $region54: #{tpu_custom_call.1} parent=1 // pred_check
      _
    $region55: #{tpu_custom_call.1} parent=1 // pred_check_branch
      %171 = sbr.rel (0) target = $region57
    $region56: #{tpu_custom_call.1} parent=1 // pred_region
      _
    $region57: #{tpu_custom_call.1} parent=1 // pred_fallthru
      _
    // Predicated region
    $region58: #{tpu_custom_call.1} parent=1 // pred_check
      _
    $region59: #{tpu_custom_call.1} parent=1 // pred_check_branch
      %173 = sbr.rel (0) target = $region61
    $region60: #{tpu_custom_call.1} parent=1 // pred_region
      %175 = dma.done [#allocation5], 128
    $region61: #{tpu_custom_call.1} parent=1 // pred_fallthru
      _
    // Predicated region
    $region62: #{tpu_custom_call.1} parent=1 // pred_check
      _
    $region63: #{tpu_custom_call.1} parent=1 // pred_check_branch
      %177 = sbr.rel (0) target = $region65
    $region64: #{tpu_custom_call.1} parent=1 // pred_region
      %179 = dma.done [#allocation8], 128
    $region65: #{tpu_custom_call.1} parent=1 // pred_fallthru
      _
    // Predicated region
    $region66: #{tpu_custom_call.1} parent=1 // pred_check
      _
    $region67: #{tpu_custom_call.1} parent=1 // pred_check_branch
      %181 = sbr.rel (0) target = $region69
    $region68: #{tpu_custom_call.1} parent=1 // pred_region
      %183 = dma.done [#allocation8], 512
    $region69: #{tpu_custom_call.1} parent=1 // pred_fallthru
      _
    // Predicated region
    $region70: #{tpu_custom_call.1} parent=1 // pred_check
      _
    $region71: #{tpu_custom_call.1} parent=1 // pred_check_branch
      %185 = sbr.rel (0) target = $region73
    $region72: #{tpu_custom_call.1} parent=1 // pred_region
      %187 = dma.done [#allocation11], 4096
    $region73: #{tpu_custom_call.1} parent=1 // pred_fallthru
      _
    // Predicated region
    $region74: #{tpu_custom_call.1} parent=1 // pred_check
      _
    $region75: #{tpu_custom_call.1} parent=1 // pred_check_branch
      %189 = sbr.rel (0) target = $region77
    $region76: #{tpu_custom_call.1} parent=1 // pred_region
      %191 = dma.done [#allocation11], 512
    $region77: #{tpu_custom_call.1} parent=1 // pred_fallthru
      _
    // Predicated region
    $region78: #{tpu_custom_call.1} parent=1 // pred_check
      _
    $region79: #{tpu_custom_call.1} parent=1 // pred_check_branch
      %193 = sbr.rel (0) target = $region81
    $region80: #{tpu_custom_call.1} parent=1 // pred_region
      %195 = dma.done [#allocation14], 16
    $region81: #{tpu_custom_call.1} parent=1 // pred_fallthru
      _
    // Predicated region
    $region82: #{tpu_custom_call.1} parent=1 // pred_check
      _
    $region83: #{tpu_custom_call.1} parent=1 // pred_check_branch
      %197 = sbr.rel (0) target = $region85
    $region84: #{tpu_custom_call.1} parent=1 // pred_region
      %199 = dma.done [#allocation14], 768
    $region85: #{tpu_custom_call.1} parent=1 // pred_fallthru
      _
    // Predicated region
    $region86: #{tpu_custom_call.1} parent=1 // pred_check
      _
    $region87: #{tpu_custom_call.1} parent=1 // pred_check_branch
      %201 = sbr.rel (0) target = $region89
    $region88: #{tpu_custom_call.1} parent=1 // pred_region
      %203 = dma.done [#allocation17], 1536
    $region89: #{tpu_custom_call.1} parent=1 // pred_fallthru
      _
    // Predicated region
    $region90: #{tpu_custom_call.1} parent=1 // pred_check
      _
    $region91: #{tpu_custom_call.1} parent=1 // pred_check_branch
      %205 = sbr.rel (0) target = $region93
    $region92: #{tpu_custom_call.1} parent=1 // pred_region
      %207 = dma.done [#allocation17], 1024
    $region93: #{tpu_custom_call.1} parent=1 // pred_fallthru
      _
    // Predicated region
    $region94: #{tpu_custom_call.1} parent=1 // pred_check
      _
    $region95: #{tpu_custom_call.1} parent=1 // pred_check_branch
      %209 = sbr.rel (0) target = $region97
    $region96: #{tpu_custom_call.1} parent=1 // pred_region
      %211 = dma.done [#allocation20], 512
    $region97: #{tpu_custom_call.1} parent=1 // pred_fallthru
      _
    // Predicated region
    $region98: #{tpu_custom_call.1} parent=1 // pred_check
      _
    $region99: #{tpu_custom_call.1} parent=1 // pred_check_branch
      %213 = sbr.rel (0) target = $region101
    $region100: #{tpu_custom_call.1} parent=1 // pred_region
      %215 = dma.done [#allocation20], 256
    $region101: #{tpu_custom_call.1} parent=1 // pred_fallthru
      _
    %p217 = scmp.eq.s32.totalorder 0, 0
    // Predicated region
    $region102: #{tpu_custom_call.1} parent=1 // pred_check
      %p218 = pneg %p217
    $region103: #{tpu_custom_call.1} parent=1 // pred_check_branch
      %220 = sbr.rel (%p218) target = $region105
    $region104: #{tpu_custom_call.1} parent=1 // pred_region
      %v221 = vld [vmem:[#allocation4] sm:$0xff]
      %v222 = vld [vmem:[#allocation7] sm:$0xff]
      %v223 = vld [vmem:[#allocation9] sm:$0xf]
      %v224 = vld [vmem:[#allocation9 + $0x4] sm:$0xf]
      %v225 = vld [vmem:[#allocation9 + $0x8] sm:$0xf]
      %v226 = vld [vmem:[#allocation9 + $0xc] sm:$0xf]
      %v227 = vld [vmem:[#allocation9 + $0x10] sm:$0xf]
      %v228 = vld [vmem:[#allocation9 + $0x14] sm:$0xf]
      %v229 = vld [vmem:[#allocation9 + $0x18] sm:$0xf]
      %v230 = vld [vmem:[#allocation9 + $0x1c] sm:$0xf]
      %v231 = vpack.c.bf16 %v222, %v222
      %v232 = vld [vmem:[#allocation10] sm:$0xff]
      %v233 = vld [vmem:[#allocation10 + $0x8] sm:$0xff]
      %v234 = vld [vmem:[#allocation10 + $0x10] sm:$0xff]
      %v235 = vld [vmem:[#allocation10 + $0x18] sm:$0xff]
      %v236 = vld [vmem:[#allocation10 + $0x20] sm:$0xff]
      %v237 = vld [vmem:[#allocation10 + $0x28] sm:$0xff]
      %v238 = vld [vmem:[#allocation10 + $0x30] sm:$0xff]
      %v239 = vld [vmem:[#allocation10 + $0x38] sm:$0xff]
      %v240 = vld [vmem:[#allocation10 + $0x40] sm:$0xff]
      %v241 = vld [vmem:[#allocation10 + $0x48] sm:$0xff]
      %v242 = vld [vmem:[#allocation10 + $0x50] sm:$0xff]
      %v243 = vld [vmem:[#allocation10 + $0x58] sm:$0xff]
      %v244 = vld [vmem:[#allocation10 + $0x60] sm:$0xff]
      %v245 = vld [vmem:[#allocation10 + $0x68] sm:$0xff]
      %v246 = vld [vmem:[#allocation10 + $0x70] sm:$0xff]
      %v247 = vld [vmem:[#allocation10 + $0x78] sm:$0xff]
      %v248 = vld [vmem:[#allocation10 + $0x80] sm:$0xff]
      %v249 = vld [vmem:[#allocation10 + $0x88] sm:$0xff]
      %v250 = vld [vmem:[#allocation10 + $0x90] sm:$0xff]
      %v251 = vld [vmem:[#allocation10 + $0x98] sm:$0xff]
      %v252 = vld [vmem:[#allocation10 + $0xa0] sm:$0xff]
      %v253 = vld [vmem:[#allocation10 + $0xa8] sm:$0xff]
      %v254 = vld [vmem:[#allocation10 + $0xb0] sm:$0xff]
      %v255 = vld [vmem:[#allocation10 + $0xb8] sm:$0xff]
      %v256 = vld [vmem:[#allocation10 + $0xc0] sm:$0xff]
      %v257 = vld [vmem:[#allocation10 + $0xc8] sm:$0xff]
      %v258 = vld [vmem:[#allocation10 + $0xd0] sm:$0xff]
      %v259 = vld [vmem:[#allocation10 + $0xd8] sm:$0xff]
      %v260 = vld [vmem:[#allocation10 + $0xe0] sm:$0xff]
      %v261 = vld [vmem:[#allocation10 + $0xe8] sm:$0xff]
      %v262 = vld [vmem:[#allocation10 + $0xf0] sm:$0xff]
      %v263 = vld [vmem:[#allocation10 + $0xf8] sm:$0xff]
      %v296 = vunpack.c.l.b16 %v232
      %v297 = vunpack.c.h.b16 %v232
      %v298 = vunpack.c.l.b16 %v233
      %v299 = vunpack.c.h.b16 %v233
      %v300 = vunpack.c.l.b16 %v234
      %v301 = vunpack.c.h.b16 %v234
      %v302 = vunpack.c.l.b16 %v235
      %v303 = vunpack.c.h.b16 %v235
      %v304 = vunpack.c.l.b16 %v236
      %v305 = vunpack.c.h.b16 %v236
      %v306 = vunpack.c.l.b16 %v237
      %v307 = vunpack.c.h.b16 %v237
      %v308 = vunpack.c.l.b16 %v238
      %v309 = vunpack.c.h.b16 %v238
      %v310 = vunpack.c.l.b16 %v239
      %v311 = vunpack.c.h.b16 %v239
      %v312 = vunpack.c.l.b16 %v240
      %v313 = vunpack.c.h.b16 %v240
      %v314 = vunpack.c.l.b16 %v241
      %v315 = vunpack.c.h.b16 %v241
      %v316 = vunpack.c.l.b16 %v242
      %v317 = vunpack.c.h.b16 %v242
      %v318 = vunpack.c.l.b16 %v243
      %v319 = vunpack.c.h.b16 %v243
      %v320 = vunpack.c.l.b16 %v244
      %v321 = vunpack.c.h.b16 %v244
      %v322 = vunpack.c.l.b16 %v245
      %v323 = vunpack.c.h.b16 %v245
      %v324 = vunpack.c.l.b16 %v246
      %v325 = vunpack.c.h.b16 %v246
      %v326 = vunpack.c.l.b16 %v247
      %v327 = vunpack.c.h.b16 %v247
      %v328 = vunpack.c.l.b16 %v248
      %v329 = vunpack.c.h.b16 %v248
      %v330 = vunpack.c.l.b16 %v249
      %v331 = vunpack.c.h.b16 %v249
      %v332 = vunpack.c.l.b16 %v250
      %v333 = vunpack.c.h.b16 %v250
      %v334 = vunpack.c.l.b16 %v251
      %v335 = vunpack.c.h.b16 %v251
      %v336 = vunpack.c.l.b16 %v252
      %v337 = vunpack.c.h.b16 %v252
      %v338 = vunpack.c.l.b16 %v253
      %v339 = vunpack.c.h.b16 %v253
      %v340 = vunpack.c.l.b16 %v254
      %v341 = vunpack.c.h.b16 %v254
      %v342 = vunpack.c.l.b16 %v255
      %v343 = vunpack.c.h.b16 %v255
      %v344 = vunpack.c.l.b16 %v256
      %v345 = vunpack.c.h.b16 %v256
      %v346 = vunpack.c.l.b16 %v257
      %v347 = vunpack.c.h.b16 %v257
      %v348 = vunpack.c.l.b16 %v258
      %v349 = vunpack.c.h.b16 %v258
      %v350 = vunpack.c.l.b16 %v259
      %v351 = vunpack.c.h.b16 %v259
      %v352 = vunpack.c.l.b16 %v260
      %v353 = vunpack.c.h.b16 %v260
      %v354 = vunpack.c.l.b16 %v261
      %v355 = vunpack.c.h.b16 %v261
      %v356 = vunpack.c.l.b16 %v262
      %v357 = vunpack.c.h.b16 %v262
      %v358 = vunpack.c.l.b16 %v263
      %v359 = vunpack.c.h.b16 %v263
      %v360 = vpack.c.b16 %v300, %v296
      %v361 = vpack.c.b16 %v301, %v297
      %v362 = vpack.c.b16 %v302, %v298
      %v363 = vpack.c.b16 %v303, %v299
      %v364 = vpack.c.b16 %v308, %v304
      %v365 = vpack.c.b16 %v309, %v305
      %v366 = vpack.c.b16 %v310, %v306
      %v367 = vpack.c.b16 %v311, %v307
      %v368 = vpack.c.b16 %v316, %v312
      %v369 = vpack.c.b16 %v317, %v313
      %v370 = vpack.c.b16 %v318, %v314
      %v371 = vpack.c.b16 %v319, %v315
      %v372 = vpack.c.b16 %v324, %v320
      %v373 = vpack.c.b16 %v325, %v321
      %v374 = vpack.c.b16 %v326, %v322
      %v375 = vpack.c.b16 %v327, %v323
      %v376 = vpack.c.b16 %v332, %v328
      %v377 = vpack.c.b16 %v333, %v329
      %v378 = vpack.c.b16 %v334, %v330
      %v379 = vpack.c.b16 %v335, %v331
      %v380 = vpack.c.b16 %v340, %v336
      %v381 = vpack.c.b16 %v341, %v337
      %v382 = vpack.c.b16 %v342, %v338
      %v383 = vpack.c.b16 %v343, %v339
      %v384 = vpack.c.b16 %v348, %v344
      %v385 = vpack.c.b16 %v349, %v345
      %v386 = vpack.c.b16 %v350, %v346
      %v387 = vpack.c.b16 %v351, %v347
      %v388 = vpack.c.b16 %v356, %v352
      %v389 = vpack.c.b16 %v357, %v353
      %v390 = vpack.c.b16 %v358, %v354
      %v391 = vpack.c.b16 %v359, %v355
      %424 = vmatpush.bf16.msra.mxu0 %v388
      %425 = vmatpush.bf16.msra.mxu0 %v384
      %426 = vmatpush.bf16.msra.mxu0 %v380
      %427 = vmatpush.bf16.msra.mxu0 %v376
      %428 = vmatpush.bf16.msra.mxu0 %v372
      %429 = vmatpush.bf16.msra.mxu0 %v368
      %430 = vmatpush.bf16.msra.mxu0 %v364
      %431 = vmatpush.bf16.msra.mxu0 %v360
      %432 = vmatmul.bf16.gmra.mxu0 %v231
      %v433 = vpop.f32.mrf.mxu0
      %v434 = vadd.f32 0.0, %v433
      %v435 = vpop.f32.mrf.mxu0
      %436 = vdwg.mxu0
      %437 = vmatpush.bf16.msra.mxu0 %v389
      %438 = vmatpush.bf16.msra.mxu0 %v385
      %439 = vmatpush.bf16.msra.mxu0 %v381
      %440 = vmatpush.bf16.msra.mxu0 %v377
      %441 = vmatpush.bf16.msra.mxu0 %v373
      %442 = vmatpush.bf16.msra.mxu0 %v369
      %443 = vmatpush.bf16.msra.mxu0 %v365
      %444 = vmatpush.bf16.msra.mxu0 %v361
      %445 = vmatmul.bf16.gmra.mxu0 %v231
      %v446 = vpop.f32.mrf.mxu0
      %v447 = vadd.f32 0.0, %v446
      %v448 = vpop.f32.mrf.mxu0
      %449 = vdwg.mxu0
      %450 = vmatpush.bf16.msra.mxu0 %v390
      %451 = vmatpush.bf16.msra.mxu0 %v386
      %452 = vmatpush.bf16.msra.mxu0 %v382
      %453 = vmatpush.bf16.msra.mxu0 %v378
      %454 = vmatpush.bf16.msra.mxu0 %v374
      %455 = vmatpush.bf16.msra.mxu0 %v370
      %456 = vmatpush.bf16.msra.mxu0 %v366
      %457 = vmatpush.bf16.msra.mxu0 %v362
      %458 = vmatmul.bf16.gmra.mxu0 %v231
      %v459 = vpop.f32.mrf.mxu0
      %v460 = vadd.f32 0.0, %v459
      %v461 = vpop.f32.mrf.mxu0
      %462 = vdwg.mxu0
      %463 = vmatpush.bf16.msra.mxu0 %v391
      %464 = vmatpush.bf16.msra.mxu0 %v387
      %465 = vmatpush.bf16.msra.mxu0 %v383
      %466 = vmatpush.bf16.msra.mxu0 %v379
      %467 = vmatpush.bf16.msra.mxu0 %v375
      %468 = vmatpush.bf16.msra.mxu0 %v371
      %469 = vmatpush.bf16.msra.mxu0 %v367
      %470 = vmatpush.bf16.msra.mxu0 %v363
      %471 = vmatmul.bf16.gmra.mxu0 %v231
      %v472 = vpop.f32.mrf.mxu0
      %v473 = vadd.f32 0.0, %v472
      %v474 = vpop.f32.mrf.mxu0
      %475 = vdwg.mxu0
      %v476 = vld [vmem:[%s9] sm:$0x7]
      %v478 = vperm.slane %v476, 0
      %v479 = vperm.slane %v476, 1
      %v480 = vperm.slane %v476, 2
      %v484 = vadd.f32 %v447, %v478
      %v485 = vadd.f32 %v460, %v479
      %v486 = vadd.f32 %v473, %v480
      %v487 = vld [vmem:[#allocation12] sm:$0xf]
      %v488 = vld [vmem:[#allocation12 + $0x4] sm:$0xf]
      %v489 = vld [vmem:[#allocation12 + $0x8] sm:$0xf]
      %v490 = vld [vmem:[#allocation12 + $0xc] sm:$0xf]
      %v491 = vld [vmem:[#allocation12 + $0x10] sm:$0xf]
      %v492 = vld [vmem:[#allocation12 + $0x14] sm:$0xf]
      %v493 = vld [vmem:[#allocation12 + $0x18] sm:$0xf]
      %v494 = vld [vmem:[#allocation12 + $0x1c] sm:$0xf]
      %v503 = vunpack.c.l.b16 %v223
      %v504 = vunpack.c.l.b16 %v224
      %v505 = vunpack.c.l.b16 %v225
      %v506 = vunpack.c.l.b16 %v226
      %v507 = vunpack.c.l.b16 %v227
      %v508 = vunpack.c.l.b16 %v228
      %v509 = vunpack.c.l.b16 %v229
      %v510 = vunpack.c.l.b16 %v230
      %v511 = vpack.c.b16 %v504, %v503
      %v512 = vpack.c.b16 %v506, %v505
      %v513 = vpack.c.b16 %v508, %v507
      %v514 = vpack.c.b16 %v510, %v509
      %v523 = vunpack.c.l.b16 %v487
      %v524 = vunpack.c.l.b16 %v488
      %v525 = vunpack.c.l.b16 %v489
      %v526 = vunpack.c.l.b16 %v490
      %v527 = vunpack.c.l.b16 %v491
      %v528 = vunpack.c.l.b16 %v492
      %v529 = vunpack.c.l.b16 %v493
      %v530 = vunpack.c.l.b16 %v494
      %v531 = vpack.c.b16 %v524, %v523
      %v532 = vpack.c.b16 %v526, %v525
      %v533 = vpack.c.b16 %v528, %v527
      %v534 = vpack.c.b16 %v530, %v529
      %vm539 = vcmask 523264
      %v541 = vsel %vm539, %v511, 0
      %v544 = vsel %vm539, %v512, 0
      %v547 = vsel %vm539, %v513, 0
      %v550 = vsel %vm539, %v514, 0
      %552 = vmatpush.bf16.msra.mxu0 0
      %553 = vmatpush.bf16.msra.mxu0 0
      %554 = vmatpush.bf16.msra.mxu0 0
      %555 = vmatpush.bf16.msra.mxu0 0
      %556 = vmatpush.bf16.msra.mxu0 %v534
      %557 = vmatpush.bf16.msra.mxu0 %v533
      %558 = vmatpush.bf16.msra.mxu0 %v532
      %559 = vmatpush.bf16.msra.mxu0 %v531
      %560 = vmatmul.bf16.gmra.mxu0 %v541
      %v561 = vpop.f32.mrf.mxu0
      %v562 = vadd.f32 0.0, %v561
      %v563 = vpop.f32.mrf.mxu0
      %v564 = vadd.f32 0.0, %v563
      %565 = vmatmul.bf16.gmra.mxu0 %v544
      %v566 = vpop.f32.mrf.mxu0
      %v567 = vadd.f32 0.0, %v566
      %v568 = vpop.f32.mrf.mxu0
      %v569 = vadd.f32 0.0, %v568
      %570 = vmatmul.bf16.gmra.mxu0 %v547
      %v571 = vpop.f32.mrf.mxu0
      %v572 = vadd.f32 0.0, %v571
      %v573 = vpop.f32.mrf.mxu0
      %v574 = vadd.f32 0.0, %v573
      %575 = vmatmul.bf16.gmra.mxu0 %v550
      %v576 = vpop.f32.mrf.mxu0
      %v577 = vadd.f32 0.0, %v576
      %v578 = vpop.f32.mrf.mxu0
      %v579 = vadd.f32 0.0, %v578
      %580 = vdwg.mxu0
      %v581 = vadd.f32 %v562, %v434
      %v582 = vadd.f32 %v564, %v434
      %v583 = vadd.f32 %v567, %v434
      %v584 = vadd.f32 %v569, %v434
      %v585 = vadd.f32 %v572, %v434
      %v586 = vadd.f32 %v574, %v434
      %v587 = vadd.f32 %v577, %v434
      %v588 = vadd.f32 %v579, %v434
      %v589 = vtanh.pop %v581
      %v590 = vtanh.pop %v582
      %v591 = vtanh.pop %v583
      %v592 = vtanh.pop %v584
      %v593 = vtanh.pop %v585
      %v594 = vtanh.pop %v586
      %v595 = vtanh.pop %v587
      %v596 = vtanh.pop %v588
      %v597 = vld [vmem:[#allocation13] sm:$0x1]
      %v599 = vperm.slane %v597, 0
      %v601 = vmul.f32 %v589, %v599
      %v602 = vmul.f32 %v590, %v599
      %v603 = vmul.f32 %v591, %v599
      %v604 = vmul.f32 %v592, %v599
      %v605 = vmul.f32 %v593, %v599
      %v606 = vmul.f32 %v594, %v599
      %v607 = vmul.f32 %v595, %v599
      %v608 = vmul.f32 %v596, %v599
      %609 = vadd.xlane.f32.xlu0 %v601
      %v610 = vpop.xlane.xlu0 %609
      %611 = vadd.xlane.f32.xlu0 %v602
      %v612 = vpop.xlane.xlu0 %611
      %613 = vadd.xlane.f32.xlu0 %v603
      %v614 = vpop.xlane.xlu0 %613
      %615 = vadd.xlane.f32.xlu0 %v604
      %v616 = vpop.xlane.xlu0 %615
      %617 = vadd.xlane.f32.xlu0 %v605
      %v618 = vpop.xlane.xlu0 %617
      %619 = vadd.xlane.f32.xlu0 %v606
      %v620 = vpop.xlane.xlu0 %619
      %621 = vadd.xlane.f32.xlu0 %v607
      %v622 = vpop.xlane.xlu0 %621
      %623 = vadd.xlane.f32.xlu0 %v608
      %v624 = vpop.xlane.xlu0 %623
      %v625 = vmax.f32 %v610, %v618
      %v626 = vmax.f32 %v612, %v620
      %v627 = vmax.f32 %v614, %v622
      %v628 = vmax.f32 %v616, %v624
      %v629 = vmax.f32 %v625, %v626
      %v630 = vmax.f32 %v627, %v628
      %v631 = vmax.f32 %v629, %v630
      %v632 = vsub.f32 %v610, %v631
      %v633 = vsub.f32 %v612, %v631
      %v634 = vsub.f32 %v614, %v631
      %v635 = vsub.f32 %v616, %v631
      %v636 = vsub.f32 %v618, %v631
      %v637 = vsub.f32 %v620, %v631
      %v638 = vsub.f32 %v622, %v631
      %v639 = vsub.f32 %v624, %v631
      %v640 = vmul.f32 %v632, 1.442695
      %v641 = vpow.pop %v640
      %v642 = vmul.f32 %v633, 1.442695
      %v643 = vpow.pop %v642
      %v644 = vmul.f32 %v634, 1.442695
      %v645 = vpow.pop %v644
      %v646 = vmul.f32 %v635, 1.442695
      %v647 = vpow.pop %v646
      %v648 = vmul.f32 %v636, 1.442695
      %v649 = vpow.pop %v648
      %v650 = vmul.f32 %v637, 1.442695
      %v651 = vpow.pop %v650
      %v652 = vmul.f32 %v638, 1.442695
      %v653 = vpow.pop %v652
      %v654 = vmul.f32 %v639, 1.442695
      %v655 = vpow.pop %v654
      %v656 = vadd.f32 %v641, %v643
      %v657 = vadd.f32 %v656, %v645
      %v658 = vadd.f32 %v657, %v647
      %v659 = vadd.f32 %v658, %v649
      %v660 = vadd.f32 %v659, %v651
      %v661 = vadd.f32 %v660, %v653
      %v662 = vadd.f32 %v661, %v655
      %v663 = vrcp.pop %v662
      %v664 = vmul.f32 %v641, %v663
      %v665 = vmul.f32 %v643, %v663
      %v666 = vmul.f32 %v645, %v663
      %v667 = vmul.f32 %v647, %v663
      %v668 = vmul.f32 %v649, %v663
      %v669 = vmul.f32 %v651, %v663
      %v670 = vmul.f32 %v653, %v663
      %v671 = vmul.f32 %v655, %v663
      %v672 = vunpack.c.l.bf16 %v223
      %v673 = vunpack.c.l.bf16 %v224
      %v674 = vunpack.c.l.bf16 %v225
      %v675 = vunpack.c.l.bf16 %v226
      %v676 = vunpack.c.l.bf16 %v227
      %v677 = vunpack.c.l.bf16 %v228
      %v678 = vunpack.c.l.bf16 %v229
      %v679 = vunpack.c.l.bf16 %v230
      %v680 = vmul.f32 %v664, %v672
      %v681 = vmul.f32 %v665, %v673
      %v682 = vmul.f32 %v666, %v674
      %v683 = vmul.f32 %v667, %v675
      %v684 = vmul.f32 %v668, %v676
      %v685 = vmul.f32 %v669, %v677
      %v686 = vmul.f32 %v670, %v678
      %v687 = vmul.f32 %v671, %v679
      %v688 = vsel %vm539, %v680, 0.0
      %v689 = vsel %vm539, %v681, 0.0
      %v690 = vadd.f32 %v688, %v689
      %v691 = vsel %vm539, %v682, 0.0
      %v692 = vadd.f32 %v690, %v691
      %v693 = vsel %vm539, %v683, 0.0
      %v694 = vadd.f32 %v692, %v693
      %v695 = vsel %vm539, %v684, 0.0
      %v696 = vadd.f32 %v694, %v695
      %v697 = vsel %vm539, %v685, 0.0
      %v698 = vadd.f32 %v696, %v697
      %v699 = vsel %vm539, %v686, 0.0
      %v700 = vadd.f32 %v698, %v699
      %v701 = vsel %vm539, %v687, 0.0
      %v702 = vadd.f32 %v700, %v701
      %v703 = vpack.c.bf16 %v221, %v221
      %v704 = vpack.c.bf16 %v702, %v702
      %v705 = vld [vmem:[#allocation15] sm:$0xff]
      %v706 = vld [vmem:[#allocation15 + $0x8] sm:$0xf]
      %v707 = vld [vmem:[#allocation15 + $0xc] sm:$0xff]
      %v708 = vld [vmem:[#allocation15 + $0x14] sm:$0xf]
      %v709 = vld [vmem:[#allocation15 + $0x18] sm:$0xff]
      %v710 = vld [vmem:[#allocation15 + $0x20] sm:$0xf]
      %v711 = vld [vmem:[#allocation15 + $0x24] sm:$0xff]
      %v712 = vld [vmem:[#allocation15 + $0x2c] sm:$0xf]
      %v713 = vld [vmem:[#allocation16] sm:$0xff]
      %v714 = vld [vmem:[#allocation16 + $0x8] sm:$0xf]
      %v715 = vld [vmem:[#allocation16 + $0xc] sm:$0xff]
      %v716 = vld [vmem:[#allocation16 + $0x14] sm:$0xf]
      %v717 = vld [vmem:[#allocation16 + $0x18] sm:$0xff]
      %v718 = vld [vmem:[#allocation16 + $0x20] sm:$0xf]
      %v719 = vld [vmem:[#allocation16 + $0x24] sm:$0xff]
      %v720 = vld [vmem:[#allocation16 + $0x2c] sm:$0xf]
      %v721 = vld [vmem:[#allocation16 + $0x30] sm:$0xff]
      %v722 = vld [vmem:[#allocation16 + $0x38] sm:$0xf]
      %v723 = vld [vmem:[#allocation16 + $0x3c] sm:$0xff]
      %v724 = vld [vmem:[#allocation16 + $0x44] sm:$0xf]
      %v725 = vld [vmem:[#allocation16 + $0x48] sm:$0xff]
      %v726 = vld [vmem:[#allocation16 + $0x50] sm:$0xf]
      %v727 = vld [vmem:[#allocation16 + $0x54] sm:$0xff]
      %v728 = vld [vmem:[#allocation16 + $0x5c] sm:$0xf]
      %v745 = vunpack.c.l.b16 %v713
      %v746 = vunpack.c.h.b16 %v713
      %v747 = vunpack.c.l.b16 %v714
      %v748 = vunpack.c.l.b16 %v715
      %v749 = vunpack.c.h.b16 %v715
      %v750 = vunpack.c.l.b16 %v716
      %v751 = vunpack.c.l.b16 %v717
      %v752 = vunpack.c.h.b16 %v717
      %v753 = vunpack.c.l.b16 %v718
      %v754 = vunpack.c.l.b16 %v719
      %v755 = vunpack.c.h.b16 %v719
      %v756 = vunpack.c.l.b16 %v720
      %v757 = vunpack.c.l.b16 %v721
      %v758 = vunpack.c.h.b16 %v721
      %v759 = vunpack.c.l.b16 %v722
      %v760 = vunpack.c.l.b16 %v723
      %v761 = vunpack.c.h.b16 %v723
      %v762 = vunpack.c.l.b16 %v724
      %v763 = vunpack.c.l.b16 %v725
      %v764 = vunpack.c.h.b16 %v725
      %v765 = vunpack.c.l.b16 %v726
      %v766 = vunpack.c.l.b16 %v727
      %v767 = vunpack.c.h.b16 %v727
      %v768 = vunpack.c.l.b16 %v728
      %v769 = vpack.c.b16 %v748, %v745
      %v770 = vpack.c.b16 %v749, %v746
      %v771 = vpack.c.b16 %v750, %v747
      %v772 = vpack.c.b16 %v754, %v751
      %v773 = vpack.c.b16 %v755, %v752
      %v774 = vpack.c.b16 %v756, %v753
      %v775 = vpack.c.b16 %v760, %v757
      %v776 = vpack.c.b16 %v761, %v758
      %v777 = vpack.c.b16 %v762, %v759
      %v778 = vpack.c.b16 %v766, %v763
      %v779 = vpack.c.b16 %v767, %v764
      %v780 = vpack.c.b16 %v768, %v765
      %v794 = vsel %vm539, %v704, 0
      %796 = vmatpush.bf16.msra.mxu0 0
      %797 = vmatpush.bf16.msra.mxu0 0
      %798 = vmatpush.bf16.msra.mxu0 0
      %799 = vmatpush.bf16.msra.mxu0 0
      %800 = vmatpush.bf16.msra.mxu0 %v778
      %801 = vmatpush.bf16.msra.mxu0 %v775
      %802 = vmatpush.bf16.msra.mxu0 %v772
      %803 = vmatpush.bf16.msra.mxu0 %v769
      %804 = vmatmul.bf16.gmra.mxu0 %v794
      %v805 = vpop.f32.mrf.mxu0
      %v806 = vadd.f32 0.0, %v805
      %v807 = vpop.f32.mrf.mxu0
      %808 = vdwg.mxu0
      %809 = vmatpush.bf16.msra.mxu0 0
      %810 = vmatpush.bf16.msra.mxu0 0
      %811 = vmatpush.bf16.msra.mxu0 0
      %812 = vmatpush.bf16.msra.mxu0 0
      %813 = vmatpush.bf16.msra.mxu0 %v779
      %814 = vmatpush.bf16.msra.mxu0 %v776
      %815 = vmatpush.bf16.msra.mxu0 %v773
      %816 = vmatpush.bf16.msra.mxu0 %v770
      %817 = vmatmul.bf16.gmra.mxu0 %v794
      %v818 = vpop.f32.mrf.mxu0
      %v819 = vadd.f32 0.0, %v818
      %v820 = vpop.f32.mrf.mxu0
      %821 = vdwg.mxu0
      %822 = vmatpush.bf16.msra.mxu0 0
      %823 = vmatpush.bf16.msra.mxu0 0
      %824 = vmatpush.bf16.msra.mxu0 0
      %825 = vmatpush.bf16.msra.mxu0 0
      %826 = vmatpush.bf16.msra.mxu0 %v780
      %827 = vmatpush.bf16.msra.mxu0 %v777
      %828 = vmatpush.bf16.msra.mxu0 %v774
      %829 = vmatpush.bf16.msra.mxu0 %v771
      %830 = vmatmul.bf16.gmra.mxu0 %v794
      %v831 = vpop.f32.mrf.mxu0
      %v832 = vadd.f32 0.0, %v831
      %v833 = vpop.f32.mrf.mxu0
      %834 = vdwg.mxu0
      %v843 = vunpack.c.l.b16 %v705
      %v844 = vunpack.c.h.b16 %v705
      %v845 = vunpack.c.l.b16 %v706
      %v846 = vunpack.c.l.b16 %v707
      %v847 = vunpack.c.h.b16 %v707
      %v848 = vunpack.c.l.b16 %v708
      %v849 = vunpack.c.l.b16 %v709
      %v850 = vunpack.c.h.b16 %v709
      %v851 = vunpack.c.l.b16 %v710
      %v852 = vunpack.c.l.b16 %v711
      %v853 = vunpack.c.h.b16 %v711
      %v854 = vunpack.c.l.b16 %v712
      %v855 = vpack.c.b16 %v846, %v843
      %v856 = vpack.c.b16 %v847, %v844
      %v857 = vpack.c.b16 %v848, %v845
      %v858 = vpack.c.b16 %v852, %v849
      %v859 = vpack.c.b16 %v853, %v850
      %v860 = vpack.c.b16 %v854, %v851
      %vm867 = vcmask 261120
      %v869 = vsel %vm867, %v703, 0
      %871 = vmatpush.bf16.msra.mxu0 0
      %872 = vmatpush.bf16.msra.mxu0 0
      %873 = vmatpush.bf16.msra.mxu0 0
      %874 = vmatpush.bf16.msra.mxu0 0
      %875 = vmatpush.bf16.msra.mxu0 0
      %876 = vmatpush.bf16.msra.mxu0 0
      %877 = vmatpush.bf16.msra.mxu0 %v858
      %878 = vmatpush.bf16.msra.mxu0 %v855
      %879 = vmatmul.bf16.gmra.mxu0 %v869
      %v880 = vpop.f32.mrf.mxu0
      %v881 = vadd.f32 %v806, %v880
      %v882 = vpop.f32.mrf.mxu0
      %883 = vdwg.mxu0
      %884 = vmatpush.bf16.msra.mxu0 0
      %885 = vmatpush.bf16.msra.mxu0 0
      %886 = vmatpush.bf16.msra.mxu0 0
      %887 = vmatpush.bf16.msra.mxu0 0
      %888 = vmatpush.bf16.msra.mxu0 0
      %889 = vmatpush.bf16.msra.mxu0 0
      %890 = vmatpush.bf16.msra.mxu0 %v859
      %891 = vmatpush.bf16.msra.mxu0 %v856
      %892 = vmatmul.bf16.gmra.mxu0 %v869
      %v893 = vpop.f32.mrf.mxu0
      %v894 = vadd.f32 %v819, %v893
      %v895 = vpop.f32.mrf.mxu0
      %896 = vdwg.mxu0
      %897 = vmatpush.bf16.msra.mxu0 0
      %898 = vmatpush.bf16.msra.mxu0 0
      %899 = vmatpush.bf16.msra.mxu0 0
      %900 = vmatpush.bf16.msra.mxu0 0
      %901 = vmatpush.bf16.msra.mxu0 0
      %902 = vmatpush.bf16.msra.mxu0 0
      %903 = vmatpush.bf16.msra.mxu0 %v860
      %904 = vmatpush.bf16.msra.mxu0 %v857
      %905 = vmatmul.bf16.gmra.mxu0 %v869
      %v906 = vpop.f32.mrf.mxu0
      %v907 = vadd.f32 %v832, %v906
      %v908 = vpop.f32.mrf.mxu0
      %909 = vdwg.mxu0
      %v910 = vld [vmem:[%s8] sm:$0x7]
      %v912 = vperm.slane %v910, 0
      %v913 = vperm.slane %v910, 1
      %v914 = vperm.slane %v910, 2
      %v918 = vadd.f32 %v881, %v912
      %v919 = vadd.f32 %v894, %v913
      %v920 = vadd.f32 %v907, %v914
      %v921 = vadd.f32 %v918, %v484
      %v922 = vxor.u32 %v921, 2147483648
      %v923 = vmul.f32 %v922, 1.442695
      %v924 = vpow.pop %v923
      %v925 = vadd.f32 %v924, 1.0
      %v926 = vrcp.pop %v925
      %v927 = vmul.f32 %v925, %v926
      %v928 = vsub.f32 1.0, %v927
      %v929 = vmul.f32 %v926, %v928
      %v930 = vadd.f32 %v926, %v929
      %vm931 = vweird.f32 %v925
      %vm932 = vweird.f32 %v926
      %vm933 = vmor %vm931, %vm932
      %v934 = vsel %vm933, %v926, %v930
      %v935 = vand.u32 2147483647, %v925
      %vm936 = vcmp.eq.f32.partialorder %v935, 8.507059e+37
      %v937 = vand.u32 %v925, 2147483648
      %v938 = vor.u32 1.1754944e-38, %v937
      %v939 = vsel %vm936, %v938, %v934
      %v940 = vmul.f32 1.0, %v939
      %v941 = vadd.f32 %v919, %v485
      %v942 = vxor.u32 %v941, 2147483648
      %v943 = vmul.f32 %v942, 1.442695
      %v944 = vpow.pop %v943
      %v945 = vadd.f32 %v944, 1.0
      %v946 = vrcp.pop %v945
      %v947 = vmul.f32 %v945, %v946
      %v948 = vsub.f32 1.0, %v947
      %v949 = vmul.f32 %v946, %v948
      %v950 = vadd.f32 %v946, %v949
      %vm951 = vweird.f32 %v945
      %vm952 = vweird.f32 %v946
      %vm953 = vmor %vm951, %vm952
      %v954 = vsel %vm953, %v946, %v950
      %v955 = vand.u32 2147483647, %v945
      %vm956 = vcmp.eq.f32.partialorder %v955, 8.507059e+37
      %v957 = vand.u32 %v945, 2147483648
      %v958 = vor.u32 1.1754944e-38, %v957
      %v959 = vsel %vm956, %v958, %v954
      %v960 = vmul.f32 1.0, %v959
      %v961 = vmul.f32 %v940, %v486
      %v962 = vadd.f32 %v920, %v961
      %v963 = vtanh.pop %v962
      %v964 = vsub.f32 1.0, %v960
      %v965 = vmul.f32 %v964, %v963
      %v966 = vmul.f32 %v960, %v222
      %v967 = vadd.f32 %v965, %v966
      %968 = vst [vmem:[#allocation23] sm:$0xff] %v967
      %v969 = vpack.c.bf16 %v967, %v967
      %970 = vst [vmem:[#allocation2] sm:$0xf] %v969
      %vm971 = vcmask 519168
      %972 = vst.msk [vmem:[#allocation3] sm:$0xf] %vm971, %v704
    $region105: #{tpu_custom_call.1} parent=1 // pred_fallthru
      _
    %v973 = vld [vmem:[#allocation2] sm:$0xf]
    %v974 = vld [vmem:[#allocation18] sm:$0xf]
    %v975 = vld [vmem:[#allocation18 + $0x4] sm:$0xf]
    %v976 = vld [vmem:[#allocation18 + $0x8] sm:$0xf]
    %v977 = vld [vmem:[#allocation18 + $0xc] sm:$0xf]
    %v978 = vld [vmem:[#allocation18 + $0x10] sm:$0xf]
    %v979 = vld [vmem:[#allocation18 + $0x14] sm:$0xf]
    %v980 = vld [vmem:[#allocation18 + $0x18] sm:$0xf]
    %v981 = vld [vmem:[#allocation18 + $0x1c] sm:$0xf]
    %v982 = vld [vmem:[#allocation18 + $0x20] sm:$0xf]
    %v983 = vld [vmem:[#allocation18 + $0x24] sm:$0xf]
    %v984 = vld [vmem:[#allocation18 + $0x28] sm:$0xf]
    %v985 = vld [vmem:[#allocation18 + $0x2c] sm:$0xf]
    %v986 = vld [vmem:[#allocation18 + $0x30] sm:$0xf]
    %v987 = vld [vmem:[#allocation18 + $0x34] sm:$0xf]
    %v988 = vld [vmem:[#allocation18 + $0x38] sm:$0xf]
    %v989 = vld [vmem:[#allocation18 + $0x3c] sm:$0xf]
    %v990 = vld [vmem:[#allocation3] sm:$0xf]
    %v991 = vld [vmem:[#allocation19] sm:$0xf]
    %v992 = vld [vmem:[#allocation19 + $0x4] sm:$0xf]
    %v993 = vld [vmem:[#allocation19 + $0x8] sm:$0xf]
    %v994 = vld [vmem:[#allocation19 + $0xc] sm:$0xf]
    %v995 = vld [vmem:[#allocation19 + $0x10] sm:$0xf]
    %v996 = vld [vmem:[#allocation19 + $0x14] sm:$0xf]
    %v997 = vld [vmem:[#allocation19 + $0x18] sm:$0xf]
    %v998 = vld [vmem:[#allocation19 + $0x1c] sm:$0xf]
    %v1007 = vunpack.c.l.b16 %v991
    %v1008 = vunpack.c.l.b16 %v992
    %v1009 = vunpack.c.l.b16 %v993
    %v1010 = vunpack.c.l.b16 %v994
    %v1011 = vunpack.c.l.b16 %v995
    %v1012 = vunpack.c.l.b16 %v996
    %v1013 = vunpack.c.l.b16 %v997
    %v1014 = vunpack.c.l.b16 %v998
    %v1015 = vpack.c.b16 %v1008, %v1007
    %v1016 = vpack.c.b16 %v1010, %v1009
    %v1017 = vpack.c.b16 %v1012, %v1011
    %v1018 = vpack.c.b16 %v1014, %v1013
    %vm1023 = vcmask 523264
    %v1025 = vsel %vm1023, %v990, 0
    %1027 = vmatpush.bf16.msra.mxu0 0
    %1028 = vmatpush.bf16.msra.mxu0 0
    %1029 = vmatpush.bf16.msra.mxu0 0
    %1030 = vmatpush.bf16.msra.mxu0 0
    %1031 = vmatpush.bf16.msra.mxu0 %v1018
    %1032 = vmatpush.bf16.msra.mxu0 %v1017
    %1033 = vmatpush.bf16.msra.mxu0 %v1016
    %1034 = vmatpush.bf16.msra.mxu0 %v1015
    %1035 = vmatmul.bf16.gmra.mxu0 %v1025
    %v1036 = vpop.f32.mrf.mxu0
    %v1037 = vadd.f32 0.0, %v1036
    %v1038 = vpop.f32.mrf.mxu0
    %1039 = vdwg.mxu0
    %v1056 = vunpack.c.l.b16 %v974
    %v1057 = vunpack.c.l.b16 %v975
    %v1058 = vunpack.c.l.b16 %v976
    %v1059 = vunpack.c.l.b16 %v977
    %v1060 = vunpack.c.l.b16 %v978
    %v1061 = vunpack.c.l.b16 %v979
    %v1062 = vunpack.c.l.b16 %v980
    %v1063 = vunpack.c.l.b16 %v981
    %v1064 = vunpack.c.l.b16 %v982
    %v1065 = vunpack.c.l.b16 %v983
    %v1066 = vunpack.c.l.b16 %v984
    %v1067 = vunpack.c.l.b16 %v985
    %v1068 = vunpack.c.l.b16 %v986
    %v1069 = vunpack.c.l.b16 %v987
    %v1070 = vunpack.c.l.b16 %v988
    %v1071 = vunpack.c.l.b16 %v989
    %v1072 = vpack.c.b16 %v1057, %v1056
    %v1073 = vpack.c.b16 %v1059, %v1058
    %v1074 = vpack.c.b16 %v1061, %v1060
    %v1075 = vpack.c.b16 %v1063, %v1062
    %v1076 = vpack.c.b16 %v1065, %v1064
    %v1077 = vpack.c.b16 %v1067, %v1066
    %v1078 = vpack.c.b16 %v1069, %v1068
    %v1079 = vpack.c.b16 %v1071, %v1070
    %1088 = vmatpush.bf16.msra.mxu0 %v1079
    %1089 = vmatpush.bf16.msra.mxu0 %v1078
    %1090 = vmatpush.bf16.msra.mxu0 %v1077
    %1091 = vmatpush.bf16.msra.mxu0 %v1076
    %1092 = vmatpush.bf16.msra.mxu0 %v1075
    %1093 = vmatpush.bf16.msra.mxu0 %v1074
    %1094 = vmatpush.bf16.msra.mxu0 %v1073
    %1095 = vmatpush.bf16.msra.mxu0 %v1072
    %1096 = vmatmul.bf16.gmra.mxu0 %v973
    %v1097 = vpop.f32.mrf.mxu0
    %v1098 = vadd.f32 %v1037, %v1097
    %v1099 = vpop.f32.mrf.mxu0
    %1100 = vdwg.mxu0
    %v1101 = vld [vmem:[#allocation4] sm:$0xff]
    %v1102 = vpack.c.bf16 %v1101, %v1101
    %v1103 = vld [vmem:[#allocation21] sm:$0xf]
    %v1104 = vld [vmem:[#allocation21 + $0x4] sm:$0xf]
    %v1105 = vld [vmem:[#allocation21 + $0x8] sm:$0xf]
    %v1106 = vld [vmem:[#allocation21 + $0xc] sm:$0xf]
    %v1111 = vunpack.c.l.b16 %v1103
    %v1112 = vunpack.c.l.b16 %v1104
    %v1113 = vunpack.c.l.b16 %v1105
    %v1114 = vunpack.c.l.b16 %v1106
    %v1115 = vpack.c.b16 %v1112, %v1111
    %v1116 = vpack.c.b16 %v1114, %v1113
    %vm1119 = vcmask 261120
    %v1121 = vsel %vm1119, %v1102, 0
    %1123 = vmatpush.bf16.msra.mxu0 0
    %1124 = vmatpush.bf16.msra.mxu0 0
    %1125 = vmatpush.bf16.msra.mxu0 0
    %1126 = vmatpush.bf16.msra.mxu0 0
    %1127 = vmatpush.bf16.msra.mxu0 0
    %1128 = vmatpush.bf16.msra.mxu0 0
    %1129 = vmatpush.bf16.msra.mxu0 %v1116
    %1130 = vmatpush.bf16.msra.mxu0 %v1115
    %1131 = vmatmul.bf16.gmra.mxu0 %v1121
    %v1132 = vpop.f32.mrf.mxu0
    %v1133 = vadd.f32 0.0, %v1132
    %v1134 = vpop.f32.mrf.mxu0
    %1135 = vdwg.mxu0
    %v1136 = vadd.f32 %v1098, %v1133
    %v1137 = vld [vmem:[%s13] sm:$0x1]
    %v1139 = vperm.slane %v1137, 0
    %v1141 = vadd.f32 %v1136, %v1139
    %1142 = vst [vmem:[#allocation22] sm:$0xff] %v1141
    // Predicated region
    $region106: #{tpu_custom_call.1} parent=1 // pred_check
      _
    $region107: #{tpu_custom_call.1} parent=1 // pred_check_branch
      %1144 = sbr.rel (0) target = $region109
    $region108: #{tpu_custom_call.1} parent=1 // pred_region
      %1146 = vsyncadd [#allocation6], 0
      %s1148 = sshll.u32 [#allocation22], 4
      %s1149 = int_to_ptr.vmem [resolvable:$true] %s1148
      %s1150 = sshll.u32 %s14, 4
      %s1151 = int_to_ptr.hbm [resolvable:$true] %s1150
      %1153 = dma.vmem_to_hbm [thread:$0]  %s1149, 128, %s1151, [#allocation6]
    $region109: #{tpu_custom_call.1} parent=1 // pred_fallthru
      _
    // Predicated region
    $region110: #{tpu_custom_call.1} parent=1 // pred_check
      _
    $region111: #{tpu_custom_call.1} parent=1 // pred_check_branch
      %1155 = sbr.rel (0) target = $region113
    $region112: #{tpu_custom_call.1} parent=1 // pred_region
      %1157 = vsyncadd [#allocation24], 0
      %s1159 = sshll.u32 [#allocation23], 4
      %s1160 = int_to_ptr.vmem [resolvable:$true] %s1159
      %s1161 = sshll.u32 %s15, 4
      %s1162 = int_to_ptr.hbm [resolvable:$true] %s1161
      %1164 = dma.vmem_to_hbm [thread:$0]  %s1160, 128, %s1162, [#allocation24]
    $region113: #{tpu_custom_call.1} parent=1 // pred_fallthru
      _
    // Predicated region
    $region114: #{tpu_custom_call.1} parent=1 // pred_check
      _
    $region115: #{tpu_custom_call.1} parent=1 // pred_check_branch
      %1166 = sbr.rel (0) target = $region117
    $region116: #{tpu_custom_call.1} parent=1 // pred_region
      %1168 = dma.done [#allocation6], 128
    $region117: #{tpu_custom_call.1} parent=1 // pred_fallthru
      _
    // Predicated region
    $region118: #{tpu_custom_call.1} parent=1 // pred_check
      _
    $region119: #{tpu_custom_call.1} parent=1 // pred_check_branch
      %1170 = sbr.rel (0) target = $region121
    $region120: #{tpu_custom_call.1} parent=1 // pred_region
      %1172 = dma.done [#allocation24], 128
    $region121: #{tpu_custom_call.1} parent=1 // pred_fallthru
      _
    %1173 = vsyncpa [#allocation5], 1
    %1174 = vsyncpa [#allocation8], 1
    %1175 = vsyncpa [#allocation11], 1
    %1176 = vsyncpa [#allocation14], 1
    %1177 = vsyncpa [#allocation17], 1
    %1178 = vsyncpa [#allocation20], 1
    %1179 = vsyncpa [#allocation6], 1
    %1180 = vsyncpa [#allocation24], 1

</llo_original>
